<compile_context>
chip_gen: v6e
topology: v6e:2x2x1
jax: 0.10.0
libtpu: 0.0.40
codegen_flags: <defaults>
</compile_context>

<pallas_src>
import jax
import jax.numpy as jnp
from jax.experimental import pallas as pl
from jax.experimental.pallas import tpu as pltpu


# ----------------------------------------------------------------------------
# Kernel
# ----------------------------------------------------------------------------
def _mlp_kernel(x_ref, z_ref,
                w1x_ref, w1z_ref, b1_ref,
                w2_ref, b2_ref,
                w3_ref, b3_ref,
                w4_ref, b4_ref,
                o_ref):
    """Full 4-layer MLP for one batch tile (concat replaced by a split-w1 sum)."""
    x = x_ref[...].astype(jnp.bfloat16)
    z = z_ref[...].astype(jnp.bfloat16)

    # Layer 1: concat([x, z], dim=1) @ w1  ==  x @ w1[:Dx] + z @ w1[Dx:]
    h = (jnp.dot(x, w1x_ref[...], preferred_element_type=jnp.float32)
         + jnp.dot(z, w1z_ref[...], preferred_element_type=jnp.float32)
         + b1_ref[...])
    h = jnp.maximum(h, 0.0)

    h = jnp.dot(h.astype(jnp.bfloat16), w2_ref[...],
                preferred_element_type=jnp.float32) + b2_ref[...]
    h = jnp.maximum(h, 0.0)

    h = jnp.dot(h.astype(jnp.bfloat16), w3_ref[...],
                preferred_element_type=jnp.float32) + b3_ref[...]
    h = jnp.maximum(h, 0.0)

    out = jnp.dot(h.astype(jnp.bfloat16), w4_ref[...],
                  preferred_element_type=jnp.float32) + b4_ref[...]
    o_ref[...] = out.astype(o_ref.dtype)


# ----------------------------------------------------------------------------
# Tiling helpers
# ----------------------------------------------------------------------------
def _round_up(x, m):
    return ((x + m - 1) // m) * m


def _num_tensorcores():
    """Best-effort TensorCore-per-chip count; defaults to 1 (v5e/v6e behavior)."""
    try:
        info = pltpu.get_tpu_info()
        for attr in ("num_cores", "num_tensorcores", "tensorcores_per_chip",
                     "cores_per_chip", "core_count"):
            n = getattr(info, attr, None)
            if isinstance(n, int) and n > 0:
                return n
    except Exception:
        pass
    try:
        kind = jax.devices()[0].device_kind.lower()
        if any(t in kind for t in ("v4", "v5p", "v7")):
            return 2
    except Exception:
        pass
    return 1


def _choose_batch_tile(batch, requested, num_cores):
    """Largest layout-clean batch tile with the fewest grid steps.

    Granularity is 16 rows (bf16 packed sublane tile) and snaps to multiples
    of 128 once the tile is >= 128 rows.  On multi-TC chips the batch is split
    into `num_cores` steps only when each per-core tile stays >= 128 rows.
    """
    def snap(n):
        g = 128 if n >= 128 else 16
        return max(16, _round_up(n, g))

    bt = snap(min(requested, batch))
    if num_cores >= 2 and pl.cdiv(batch, bt) < num_cores:
        per_core = snap(pl.cdiv(batch, num_cores))
        if per_core >= 128:
            bt = per_core
    return bt


def _grid_invariant_spec(shape):
    """Single-buffered BlockSpec for operands that never change across the grid."""
    try:
        return pl.BlockSpec(shape, lambda i: (0, 0),
                            pipeline_mode=pl.Buffered(1))
    except TypeError:
        # Older JAX without pipeline_mode: fall back to default double-buffering.
        return pl.BlockSpec(shape, lambda i: (0, 0))


# ----------------------------------------------------------------------------
# One-time weight preparation (hoisted out of the forward path)
# ----------------------------------------------------------------------------
def prepare_params(params, input_dim):
    """Split w1, cast weights to bf16, pad w4/b4 lane-dense.  Call once."""
    H = params["w1"].shape[1]
    D = params["w4"].shape[1]
    D_pad = pl.cdiv(D, 128) * 128

    w4, b4 = params["w4"], params["b4"]
    if D_pad != D:
        w4 = jnp.pad(w4, ((0, 0), (0, D_pad - D)))
        b4 = jnp.pad(b4, ((0, 0), (0, D_pad - D)))

    wdt = jnp.bfloat16
    return {
        "w1x": params["w1"][:input_dim, :].astype(wdt),
        "w1z": params["w1"][input_dim:, :].astype(wdt),
        "b1": params["b1"].astype(jnp.float32),
        "w2": params["w2"].astype(wdt),
        "b2": params["b2"].astype(jnp.float32),
        "w3": params["w3"].astype(wdt),
        "b3": params["b3"].astype(jnp.float32),
        "w4": w4.astype(wdt),
        "b4": b4.astype(jnp.float32),
        "H": H,
        "D": D,
        "D_pad": D_pad,
    }


# ----------------------------------------------------------------------------
# Forward
# ----------------------------------------------------------------------------
def mlp_generator_forward(x, z, prepared, *, batch_tile=512, out_dtype=None,
                          vmem_limit_bytes=None):
    """Pallas implementation of MLPGenerator.forward.

    x: (B, input_dim) float32
    z: (B, noise_dim) float32
    prepared: output of prepare_params()
    """
    B, Dx = x.shape
    _, Dz = z.shape
    H = prepared["H"]
    D = prepared["D"]
    D_pad = prepared["D_pad"]
    out_dtype = out_dtype or x.dtype

    w1x, w1z = prepared["w1x"], prepared["w1z"]
    w2, w3, w4 = prepared["w2"], prepared["w3"], prepared["w4"]
    b1, b2, b3, b4 = prepared["b1"], prepared["b2"], prepared["b3"], prepared["b4"]

    # --- Batch tiling: fewest grid steps, layout-clean tiles. ---
    bt = _choose_batch_tile(B, batch_tile, _num_tensorcores())
    B_pad = pl.cdiv(B, bt) * bt
    if B_pad != B:
        x = jnp.pad(x, ((0, B_pad - B), (0, 0)))
        z = jnp.pad(z, ((0, B_pad - B), (0, 0)))
    grid = (B_pad // bt,)

    def batch_map(i):
        return (i, 0)

    in_specs = [
        pl.BlockSpec((bt, Dx), batch_map),        # x tile
        pl.BlockSpec((bt, Dz), batch_map),        # z tile
        _grid_invariant_spec(w1x.shape),
        _grid_invariant_spec(w1z.shape),
        _grid_invariant_spec(b1.shape),
        _grid_invariant_spec(w2.shape),
        _grid_invariant_spec(b2.shape),
        _grid_invariant_spec(w3.shape),
        _grid_invariant_spec(b3.shape),
        _grid_invariant_spec(w4.shape),
        _grid_invariant_spec(b4.shape),
    ]
    out_spec = pl.BlockSpec((bt, D_pad), batch_map)

    flops = 2 * B_pad * ((Dx + Dz) * H + 2 * H * H + H * D_pad)
    weight_bytes = sum(int(a.size) * a.dtype.itemsize
                       for a in (w1x, w1z, w2, w3, w4, b1, b2, b3, b4))
    out_itemsize = jnp.dtype(out_dtype).itemsize
    bytes_accessed = (weight_bytes
                      + B_pad * (Dx + Dz) * x.dtype.itemsize
                      + B_pad * D_pad * out_itemsize)
    cost = pl.CostEstimate(flops=flops, transcendentals=0,
                           bytes_accessed=bytes_accessed)

    cp_kwargs = dict(dimension_semantics=("parallel",))
    if vmem_limit_bytes is not None:
        cp_kwargs["vmem_limit_bytes"] = vmem_limit_bytes

    out_padded = pl.pallas_call(
        _mlp_kernel,
        out_shape=jax.ShapeDtypeStruct((B_pad, D_pad), out_dtype),
        grid_spec=pltpu.PrefetchScalarGridSpec(
            num_scalar_prefetch=0,
            grid=grid,
            in_specs=in_specs,
            out_specs=out_spec,
        ),
        compiler_params=pltpu.CompilerParams(**cp_kwargs),
        cost_estimate=cost,
    )(x, z, w1x, w1z, b1, w2, b2, w3, b3, w4, b4)

    return out_padded[:B, :D]


# ----------------------------------------------------------------------------
# Init / reference
# ----------------------------------------------------------------------------
def init_params(key, input_dim, noise_dim, hidden_dim):
    """Deterministic init matching the PyTorch module's shapes.

    PyTorch nn.Linear(in, out) has weight (out, in), bias (out,), both
    U(-1/sqrt(in), 1/sqrt(in)).  We store weights transposed to (in, out).
    """
    dims = [
        (input_dim + noise_dim, hidden_dim),
        (hidden_dim, hidden_dim),
        (hidden_dim, hidden_dim),
        (hidden_dim, input_dim),
    ]
    params = {}
    keys = jax.random.split(key, 2 * len(dims))
    for i, (fan_in, fan_out) in enumerate(dims):
        bound = 1.0 / jnp.sqrt(jnp.float32(fan_in))
        w = jax.random.uniform(keys[2 * i], (fan_in, fan_out),
                               minval=-bound, maxval=bound, dtype=jnp.float32)
        b = jax.random.uniform(keys[2 * i + 1], (1, fan_out),
                               minval=-bound, maxval=bound, dtype=jnp.float32)
        params[f"w{i + 1}"] = w
        params[f"b{i + 1}"] = b
    return params


def reference_forward(x, z, params):
    """Pure-JAX reference replicating the kernel's bf16-operand / f32-acc math."""
    Dx = x.shape[1]
    wdt = jnp.bfloat16

    def dot(a, w):
        return jnp.dot(a.astype(wdt), w.astype(wdt),
                       preferred_element_type=jnp.float32)

    h = dot(x, params["w1"][:Dx, :]) + dot(z, params["w1"][Dx:, :]) + params["b1"]
    h = jnp.maximum(h, 0.0)
    h = jnp.maximum(dot(h, params["w2"]) + params["b2"], 0.0)
    h = jnp.maximum(dot(h, params["w3"]) + params["b3"], 0.0)
    return dot(h, params["w4"]) + params["b4"]


# ----------------------------------------------------------------------------
# Demo / self-test
# ----------------------------------------------------------------------------
if __name__ == "__main__":
    # Small shapes consistent with the module: input_dim=48, noise_dim=16
    # (module default), hidden_dim=128; batch=256 -> a single 256-row grid
    # step on 1-TC chips, two 128-row steps on 2-TC chips.
    batch, input_dim, noise_dim, hidden_dim = 256, 48, 16, 128

    key = jax.random.PRNGKey(0)
    k_x, k_z, k_p = jax.random.split(key, 3)

    x = jax.random.normal(k_x, (batch, input_dim), dtype=jnp.float32)
    z = jax.random.normal(k_z, (batch, noise_dim), dtype=jnp.float32)
    params = init_params(k_p, input_dim, noise_dim, hidden_dim)

    # One-time weight preparation (outside the forward path).
    prepared = prepare_params(params, input_dim)
    prepared = jax.tree_util.tree_map(
        lambda a: jax.block_until_ready(a) if hasattr(a, "block_until_ready") else a,
        prepared)

    out = mlp_generator_forward(x, z, prepared)
    out = jax.block_until_ready(out)

    ref = reference_forward(x, z, params)
    assert out.shape == (batch, input_dim)
    assert jnp.allclose(out, ref, atol=2e-3, rtol=2e-3), (
        float(jnp.max(jnp.abs(out - ref))))

    print("KERNEL_OK")
</pallas_src>

<mosaic_0001>
module attributes {stable_mosaic.version = 11 : i64} {
  func.func @_mlp_kernel(%arg0: i32, %arg1: memref<256x48xf32, #tpu.memory_space<vmem>>, %arg2: memref<256x16xf32, #tpu.memory_space<vmem>>, %arg3: memref<48x128xbf16, #tpu.memory_space<vmem>>, %arg4: memref<16x128xbf16, #tpu.memory_space<vmem>>, %arg5: memref<1x128xf32, #tpu.memory_space<vmem>>, %arg6: memref<128x128xbf16, #tpu.memory_space<vmem>>, %arg7: memref<1x128xf32, #tpu.memory_space<vmem>>, %arg8: memref<128x128xbf16, #tpu.memory_space<vmem>>, %arg9: memref<1x128xf32, #tpu.memory_space<vmem>>, %arg10: memref<128x128xbf16, #tpu.memory_space<vmem>>, %arg11: memref<1x128xf32, #tpu.memory_space<vmem>>, %arg12: memref<256x128xf32, #tpu.memory_space<vmem>>) attributes {dimension_semantics = [#tpu.dimension_semantics<parallel>], iteration_bounds = array<i64: 1>, scalar_prefetch = 0 : i64, scratch_operands = 0 : i64, tpu.core_type = #tpu.core_type<tc>, window_params = [{transform_indices = @transform_0, window_bounds = array<i64: 256, 48>}, {transform_indices = @transform_1, window_bounds = array<i64: 256, 16>}, {pipeline_mode = #tpu.pipeline_mode<synchronous>, transform_indices = @transform_2, window_bounds = array<i64: 48, 128>}, {pipeline_mode = #tpu.pipeline_mode<synchronous>, transform_indices = @transform_3, window_bounds = array<i64: 16, 128>}, {pipeline_mode = #tpu.pipeline_mode<synchronous>, transform_indices = @transform_4, window_bounds = array<i64: 1, 128>}, {pipeline_mode = #tpu.pipeline_mode<synchronous>, transform_indices = @transform_5, window_bounds = array<i64: 128, 128>}, {pipeline_mode = #tpu.pipeline_mode<synchronous>, transform_indices = @transform_6, window_bounds = array<i64: 1, 128>}, {pipeline_mode = #tpu.pipeline_mode<synchronous>, transform_indices = @transform_7, window_bounds = array<i64: 128, 128>}, {pipeline_mode = #tpu.pipeline_mode<synchronous>, transform_indices = @transform_8, window_bounds = array<i64: 1, 128>}, {pipeline_mode = #tpu.pipeline_mode<synchronous>, transform_indices = @transform_9, window_bounds = array<i64: 128, 128>}, {pipeline_mode = #tpu.pipeline_mode<synchronous>, transform_indices = @transform_10, window_bounds = array<i64: 1, 128>}, {transform_indices = @transform_11, window_bounds = array<i64: 256, 128>}]} {
    %c0 = arith.constant 0 : index
    %c0_0 = arith.constant 0 : index
    %0 = vector.load %arg1[%c0, %c0_0] : memref<256x48xf32, #tpu.memory_space<vmem>>, vector<256x48xf32>
    %1 = arith.truncf %0 : vector<256x48xf32> to vector<256x48xbf16>
    %c0_1 = arith.constant 0 : index
    %c0_2 = arith.constant 0 : index
    %2 = vector.load %arg2[%c0_1, %c0_2] : memref<256x16xf32, #tpu.memory_space<vmem>>, vector<256x16xf32>
    %3 = arith.truncf %2 : vector<256x16xf32> to vector<256x16xbf16>
    %c0_3 = arith.constant 0 : index
    %c0_4 = arith.constant 0 : index
    %4 = vector.load %arg3[%c0_3, %c0_4] : memref<48x128xbf16, #tpu.memory_space<vmem>>, vector<48x128xbf16>
    %cst = arith.constant dense<0.000000e+00> : vector<256x128xf32>
    %5 = tpu.matmul %1, %4, %cst {dimension_numbers = #tpu.dot_dimension_numbers<[1], [0], [0], [1], [0, 0, 1, 1], [], []>} : vector<256x48xbf16>, vector<48x128xbf16>, vector<256x128xf32> -> vector<256x128xf32>
    %c0_5 = arith.constant 0 : index
    %c0_6 = arith.constant 0 : index
    %6 = vector.load %arg4[%c0_5, %c0_6] : memref<16x128xbf16, #tpu.memory_space<vmem>>, vector<16x128xbf16>
    %cst_7 = arith.constant dense<0.000000e+00> : vector<256x128xf32>
    %7 = tpu.matmul %3, %6, %cst_7 {dimension_numbers = #tpu.dot_dimension_numbers<[1], [0], [0], [1], [0, 0, 1, 1], [], []>} : vector<256x16xbf16>, vector<16x128xbf16>, vector<256x128xf32> -> vector<256x128xf32>
    %8 = arith.addf %5, %7 : vector<256x128xf32>
    %c0_8 = arith.constant 0 : index
    %c0_9 = arith.constant 0 : index
    %9 = vector.load %arg5[%c0_8, %c0_9] : memref<1x128xf32, #tpu.memory_space<vmem>>, vector<1x128xf32>
    %10 = vector.broadcast %9 : vector<1x128xf32> to vector<256x128xf32>
    %11 = arith.addf %8, %10 : vector<256x128xf32>
    %cst_10 = arith.constant 0.000000e+00 : f32
    %12 = vector.broadcast %cst_10 : f32 to vector<256x128xf32>
    %13 = arith.maximumf %11, %12 : vector<256x128xf32>
    %14 = arith.truncf %13 : vector<256x128xf32> to vector<256x128xbf16>
    %c0_11 = arith.constant 0 : index
    %c0_12 = arith.constant 0 : index
    %15 = vector.load %arg6[%c0_11, %c0_12] : memref<128x128xbf16, #tpu.memory_space<vmem>>, vector<128x128xbf16>
    %cst_13 = arith.constant dense<0.000000e+00> : vector<256x128xf32>
    %16 = tpu.matmul %14, %15, %cst_13 {dimension_numbers = #tpu.dot_dimension_numbers<[1], [0], [0], [1], [0, 0, 1, 1], [], []>} : vector<256x128xbf16>, vector<128x128xbf16>, vector<256x128xf32> -> vector<256x128xf32>
    %c0_14 = arith.constant 0 : index
    %c0_15 = arith.constant 0 : index
    %17 = vector.load %arg7[%c0_14, %c0_15] : memref<1x128xf32, #tpu.memory_space<vmem>>, vector<1x128xf32>
    %18 = vector.broadcast %17 : vector<1x128xf32> to vector<256x128xf32>
    %19 = arith.addf %16, %18 : vector<256x128xf32>
    %cst_16 = arith.constant 0.000000e+00 : f32
    %20 = vector.broadcast %cst_16 : f32 to vector<256x128xf32>
    %21 = arith.maximumf %19, %20 : vector<256x128xf32>
    %22 = arith.truncf %21 : vector<256x128xf32> to vector<256x128xbf16>
    %c0_17 = arith.constant 0 : index
    %c0_18 = arith.constant 0 : index
    %23 = vector.load %arg8[%c0_17, %c0_18] : memref<128x128xbf16, #tpu.memory_space<vmem>>, vector<128x128xbf16>
    %cst_19 = arith.constant dense<0.000000e+00> : vector<256x128xf32>
    %24 = tpu.matmul %22, %23, %cst_19 {dimension_numbers = #tpu.dot_dimension_numbers<[1], [0], [0], [1], [0, 0, 1, 1], [], []>} : vector<256x128xbf16>, vector<128x128xbf16>, vector<256x128xf32> -> vector<256x128xf32>
    %c0_20 = arith.constant 0 : index
    %c0_21 = arith.constant 0 : index
    %25 = vector.load %arg9[%c0_20, %c0_21] : memref<1x128xf32, #tpu.memory_space<vmem>>, vector<1x128xf32>
    %26 = vector.broadcast %25 : vector<1x128xf32> to vector<256x128xf32>
    %27 = arith.addf %24, %26 : vector<256x128xf32>
    %cst_22 = arith.constant 0.000000e+00 : f32
    %28 = vector.broadcast %cst_22 : f32 to vector<256x128xf32>
    %29 = arith.maximumf %27, %28 : vector<256x128xf32>
    %30 = arith.truncf %29 : vector<256x128xf32> to vector<256x128xbf16>
    %c0_23 = arith.constant 0 : index
    %c0_24 = arith.constant 0 : index
    %31 = vector.load %arg10[%c0_23, %c0_24] : memref<128x128xbf16, #tpu.memory_space<vmem>>, vector<128x128xbf16>
    %cst_25 = arith.constant dense<0.000000e+00> : vector<256x128xf32>
    %32 = tpu.matmul %30, %31, %cst_25 {dimension_numbers = #tpu.dot_dimension_numbers<[1], [0], [0], [1], [0, 0, 1, 1], [], []>} : vector<256x128xbf16>, vector<128x128xbf16>, vector<256x128xf32> -> vector<256x128xf32>
    %c0_26 = arith.constant 0 : index
    %c0_27 = arith.constant 0 : index
    %33 = vector.load %arg11[%c0_26, %c0_27] : memref<1x128xf32, #tpu.memory_space<vmem>>, vector<1x128xf32>
    %34 = vector.broadcast %33 : vector<1x128xf32> to vector<256x128xf32>
    %35 = arith.addf %32, %34 : vector<256x128xf32>
    %c0_28 = arith.constant 0 : index
    %c0_29 = arith.constant 0 : index
    %36 = vector.load %arg12[%c0_28, %c0_29] : memref<256x128xf32, #tpu.memory_space<vmem>>, vector<256x128xf32>
    tpu.vector_store %arg12[%c0_28, %c0_29], %35 {strides = array<i32>} : memref<256x128xf32, #tpu.memory_space<vmem>>, vector<256x128xf32>,
    return
  }
  func.func @transform_0(%arg0: i32) -> (i32, i32) {
    %c0_i32 = arith.constant 0 : i32
    %c0_i32_0 = arith.constant 0 : i32
    return %arg0, %c0_i32 : i32, i32
  }
  func.func @transform_1(%arg0: i32) -> (i32, i32) {
    %c0_i32 = arith.constant 0 : i32
    %c0_i32_0 = arith.constant 0 : i32
    return %arg0, %c0_i32 : i32, i32
  }
  func.func @transform_2(%arg0: i32) -> (i32, i32) {
    %c0_i32 = arith.constant 0 : i32
    %c0_i32_0 = arith.constant 0 : i32
    %c0_i32_1 = arith.constant 0 : i32
    return %c0_i32, %c0_i32_0 : i32, i32
  }
  func.func @transform_3(%arg0: i32) -> (i32, i32) {
    %c0_i32 = arith.constant 0 : i32
    %c0_i32_0 = arith.constant 0 : i32
    %c0_i32_1 = arith.constant 0 : i32
    return %c0_i32, %c0_i32_0 : i32, i32
  }
  func.func @transform_4(%arg0: i32) -> (i32, i32) {
    %c0_i32 = arith.constant 0 : i32
    %c0_i32_0 = arith.constant 0 : i32
    %c0_i32_1 = arith.constant 0 : i32
    return %c0_i32, %c0_i32_0 : i32, i32
  }
  func.func @transform_5(%arg0: i32) -> (i32, i32) {
    %c0_i32 = arith.constant 0 : i32
    %c0_i32_0 = arith.constant 0 : i32
    %c0_i32_1 = arith.constant 0 : i32
    return %c0_i32, %c0_i32_0 : i32, i32
  }
  func.func @transform_6(%arg0: i32) -> (i32, i32) {
    %c0_i32 = arith.constant 0 : i32
    %c0_i32_0 = arith.constant 0 : i32
    %c0_i32_1 = arith.constant 0 : i32
    return %c0_i32, %c0_i32_0 : i32, i32
  }
  func.func @transform_7(%arg0: i32) -> (i32, i32) {
    %c0_i32 = arith.constant 0 : i32
    %c0_i32_0 = arith.constant 0 : i32
    %c0_i32_1 = arith.constant 0 : i32
    return %c0_i32, %c0_i32_0 : i32, i32
  }
  func.func @transform_8(%arg0: i32) -> (i32, i32) {
    %c0_i32 = arith.constant 0 : i32
    %c0_i32_0 = arith.constant 0 : i32
    %c0_i32_1 = arith.constant 0 : i32
    return %c0_i32, %c0_i32_0 : i32, i32
  }
  func.func @transform_9(%arg0: i32) -> (i32, i32) {
    %c0_i32 = arith.constant 0 : i32
    %c0_i32_0 = arith.constant 0 : i32
    %c0_i32_1 = arith.constant 0 : i32
    return %c0_i32, %c0_i32_0 : i32, i32
  }
  func.func @transform_10(%arg0: i32) -> (i32, i32) {
    %c0_i32 = arith.constant 0 : i32
    %c0_i32_0 = arith.constant 0 : i32
    %c0_i32_1 = arith.constant 0 : i32
    return %c0_i32, %c0_i32_0 : i32, i32
  }
  func.func @transform_11(%arg0: i32) -> (i32, i32) {
    %c0_i32 = arith.constant 0 : i32
    %c0_i32_0 = arith.constant 0 : i32
    return %arg0, %c0_i32 : i32, i32
  }
}

</mosaic_0001>

<llo_original>
// kernel: tpu_custom_call.1
$region0: #{tpu_custom_call.1}
  #allocation0 [shape = 'u32[]', space=smem, size = 0x4, offset = 0x4, fixed_abs, tag = 'smem constant byte address 0x4 - core index']
  #allocation1 [shape = 'u32[144,128]{1,0:T(1,128)}', space=vmem, size = 0x12000, scoped, tag = 'internal scratch']
  %s0 = inlined_call_operand.vmem [shape: f32[256,48], index: 0, kind: input, shape index: {}]
  %s1 = inlined_call_operand.vmem [shape: f32[256,16], index: 1, kind: input, shape index: {}]
  %s2 = inlined_call_operand.vmem [shape: bf16[48,128], index: 2, kind: input, shape index: {}]
  %s3 = inlined_call_operand.vmem [shape: bf16[16,128], index: 3, kind: input, shape index: {}]
  %s4 = inlined_call_operand.vmem [shape: f32[1,128], index: 4, kind: input, shape index: {}]
  %s5 = inlined_call_operand.vmem [shape: bf16[128,128], index: 5, kind: input, shape index: {}]
  %s6 = inlined_call_operand.vmem [shape: f32[1,128], index: 6, kind: input, shape index: {}]
  %s7 = inlined_call_operand.vmem [shape: bf16[128,128], index: 7, kind: input, shape index: {}]
  %s8 = inlined_call_operand.vmem [shape: f32[1,128], index: 8, kind: input, shape index: {}]
  %s9 = inlined_call_operand.vmem [shape: bf16[128,128], index: 9, kind: input, shape index: {}]
  %s10 = inlined_call_operand.vmem [shape: f32[1,128], index: 10, kind: input, shape index: {}]
  %s11 = inlined_call_operand.hbm [shape: f32[256,128], index: 11, kind: output, shape index: {}]
  %s12 = sld [smem:[#allocation0]]
  $region54: #{tpu_custom_call.1} parent=0
    _
  %s14 = ssub.s32 1, %s12
  %s15 = scalar_select 0, %s14, %s12
  $region1: #{tpu_custom_call.1} parent=0
    #allocation2 [shape = 'u8[131072]{0}', space=vmem, size = 0x20000, scoped, tag = 'output window, operand 0, single buffered']
    #allocation3 [shape = 's32[1]{0}', space=sflag, size = 0x4, scoped, tag = 'scoped memory for tpu_custom_call.1']
    %16 = vsyncpa [#allocation3], 0
    // Predicated region
    $region2: #{tpu_custom_call.1} parent=1 // pred_check
      _
    $region3: #{tpu_custom_call.1} parent=1 // pred_check_branch
      %18 = sbr.rel (0) target = $region5
    $region4: #{tpu_custom_call.1} parent=1 // pred_region
      _
    $region5: #{tpu_custom_call.1} parent=1 // pred_fallthru
      _
    // Predicated region
    $region6: #{tpu_custom_call.1} parent=1 // pred_check
      _
    $region7: #{tpu_custom_call.1} parent=1 // pred_check_branch
      %20 = sbr.rel (0) target = $region9
    $region8: #{tpu_custom_call.1} parent=1 // pred_region
      _
    $region9: #{tpu_custom_call.1} parent=1 // pred_fallthru
      _
    // Predicated region
    $region10: #{tpu_custom_call.1} parent=1 // pred_check
      _
    $region11: #{tpu_custom_call.1} parent=1 // pred_check_branch
      %22 = sbr.rel (0) target = $region13
    $region12: #{tpu_custom_call.1} parent=1 // pred_region
      _
    $region13: #{tpu_custom_call.1} parent=1 // pred_fallthru
      _
    // Predicated region
    $region14: #{tpu_custom_call.1} parent=1 // pred_check
      _
    $region15: #{tpu_custom_call.1} parent=1 // pred_check_branch
      %24 = sbr.rel (0) target = $region17
    $region16: #{tpu_custom_call.1} parent=1 // pred_region
      _
    $region17: #{tpu_custom_call.1} parent=1 // pred_fallthru
      _
    // Predicated region
    $region18: #{tpu_custom_call.1} parent=1 // pred_check
      _
    $region19: #{tpu_custom_call.1} parent=1 // pred_check_branch
      %26 = sbr.rel (0) target = $region21
    $region20: #{tpu_custom_call.1} parent=1 // pred_region
      _
    $region21: #{tpu_custom_call.1} parent=1 // pred_fallthru
      _
    // Predicated region
    $region22: #{tpu_custom_call.1} parent=1 // pred_check
      _
    $region23: #{tpu_custom_call.1} parent=1 // pred_check_branch
      %28 = sbr.rel (0) target = $region25
    $region24: #{tpu_custom_call.1} parent=1 // pred_region
      _
    $region25: #{tpu_custom_call.1} parent=1 // pred_fallthru
      _
    // Predicated region
    $region26: #{tpu_custom_call.1} parent=1 // pred_check
      _
    $region27: #{tpu_custom_call.1} parent=1 // pred_check_branch
      %30 = sbr.rel (0) target = $region29
    $region28: #{tpu_custom_call.1} parent=1 // pred_region
      _
    $region29: #{tpu_custom_call.1} parent=1 // pred_fallthru
      _
    // Predicated region
    $region30: #{tpu_custom_call.1} parent=1 // pred_check
      _
    $region31: #{tpu_custom_call.1} parent=1 // pred_check_branch
      %32 = sbr.rel (0) target = $region33
    $region32: #{tpu_custom_call.1} parent=1 // pred_region
      _
    $region33: #{tpu_custom_call.1} parent=1 // pred_fallthru
      _
    // Predicated region
    $region34: #{tpu_custom_call.1} parent=1 // pred_check
      _
    $region35: #{tpu_custom_call.1} parent=1 // pred_check_branch
      %34 = sbr.rel (0) target = $region37
    $region36: #{tpu_custom_call.1} parent=1 // pred_region
      _
    $region37: #{tpu_custom_call.1} parent=1 // pred_fallthru
      _
    // Predicated region
    $region38: #{tpu_custom_call.1} parent=1 // pred_check
      _
    $region39: #{tpu_custom_call.1} parent=1 // pred_check_branch
      %36 = sbr.rel (0) target = $region41
    $region40: #{tpu_custom_call.1} parent=1 // pred_region
      _
    $region41: #{tpu_custom_call.1} parent=1 // pred_fallthru
      _
    // Predicated region
    $region42: #{tpu_custom_call.1} parent=1 // pred_check
      _
    $region43: #{tpu_custom_call.1} parent=1 // pred_check_branch
      %38 = sbr.rel (0) target = $region45
    $region44: #{tpu_custom_call.1} parent=1 // pred_region
      _
    $region45: #{tpu_custom_call.1} parent=1 // pred_fallthru
      _
    %v40 = vld [vmem:[%s0] sm:$0xff]
    %v41 = vld [vmem:[%s0 + $0x8] sm:$0xff]
    %v42 = vld [vmem:[%s0 + $0x10] sm:$0xff]
    %v43 = vld [vmem:[%s0 + $0x18] sm:$0xff]
    %v44 = vld [vmem:[%s0 + $0x20] sm:$0xff]
    %v45 = vld [vmem:[%s0 + $0x28] sm:$0xff]
    %v46 = vld [vmem:[%s0 + $0x30] sm:$0xff]
    %v47 = vld [vmem:[%s0 + $0x38] sm:$0xff]
    %v48 = vld [vmem:[%s0 + $0x40] sm:$0xff]
    %v49 = vld [vmem:[%s0 + $0x48] sm:$0xff]
    %v50 = vld [vmem:[%s0 + $0x50] sm:$0xff]
    %v51 = vld [vmem:[%s0 + $0x58] sm:$0xff]
    %v52 = vld [vmem:[%s0 + $0x60] sm:$0xff]
    %v53 = vld [vmem:[%s0 + $0x68] sm:$0xff]
    %v54 = vld [vmem:[%s0 + $0x70] sm:$0xff]
    %v55 = vld [vmem:[%s0 + $0x78] sm:$0xff]
    %v56 = vld [vmem:[%s0 + $0x80] sm:$0xff]
    %v57 = vld [vmem:[%s0 + $0x88] sm:$0xff]
    %v58 = vld [vmem:[%s0 + $0x90] sm:$0xff]
    %v59 = vld [vmem:[%s0 + $0x98] sm:$0xff]
    %v60 = vld [vmem:[%s0 + $0xa0] sm:$0xff]
    %v61 = vld [vmem:[%s0 + $0xa8] sm:$0xff]
    %v62 = vld [vmem:[%s0 + $0xb0] sm:$0xff]
    %v63 = vld [vmem:[%s0 + $0xb8] sm:$0xff]
    %v64 = vld [vmem:[%s0 + $0xc0] sm:$0xff]
    %v65 = vld [vmem:[%s0 + $0xc8] sm:$0xff]
    %v66 = vld [vmem:[%s0 + $0xd0] sm:$0xff]
    %v67 = vld [vmem:[%s0 + $0xd8] sm:$0xff]
    %v68 = vld [vmem:[%s0 + $0xe0] sm:$0xff]
    %v69 = vld [vmem:[%s0 + $0xe8] sm:$0xff]
    %v70 = vld [vmem:[%s0 + $0xf0] sm:$0xff]
    %v71 = vld [vmem:[%s0 + $0xf8] sm:$0xff]
    %v72 = vpack.c.bf16 %v41, %v40
    %v73 = vpack.c.bf16 %v43, %v42
    %v74 = vpack.c.bf16 %v45, %v44
    %v75 = vpack.c.bf16 %v47, %v46
    %v76 = vpack.c.bf16 %v49, %v48
    %v77 = vpack.c.bf16 %v51, %v50
    %v78 = vpack.c.bf16 %v53, %v52
    %v79 = vpack.c.bf16 %v55, %v54
    %v80 = vpack.c.bf16 %v57, %v56
    %v81 = vpack.c.bf16 %v59, %v58
    %v82 = vpack.c.bf16 %v61, %v60
    %v83 = vpack.c.bf16 %v63, %v62
    %v84 = vpack.c.bf16 %v65, %v64
    %v85 = vpack.c.bf16 %v67, %v66
    %v86 = vpack.c.bf16 %v69, %v68
    %v87 = vpack.c.bf16 %v71, %v70
    %v88 = vld [vmem:[%s1] sm:$0xff]
    %v89 = vld [vmem:[%s1 + $0x8] sm:$0xff]
    %v90 = vld [vmem:[%s1 + $0x10] sm:$0xff]
    %v91 = vld [vmem:[%s1 + $0x18] sm:$0xff]
    %v92 = vld [vmem:[%s1 + $0x20] sm:$0xff]
    %v93 = vld [vmem:[%s1 + $0x28] sm:$0xff]
    %v94 = vld [vmem:[%s1 + $0x30] sm:$0xff]
    %v95 = vld [vmem:[%s1 + $0x38] sm:$0xff]
    %v96 = vld [vmem:[%s1 + $0x40] sm:$0xff]
    %v97 = vld [vmem:[%s1 + $0x48] sm:$0xff]
    %v98 = vld [vmem:[%s1 + $0x50] sm:$0xff]
    %v99 = vld [vmem:[%s1 + $0x58] sm:$0xff]
    %v100 = vld [vmem:[%s1 + $0x60] sm:$0xff]
    %v101 = vld [vmem:[%s1 + $0x68] sm:$0xff]
    %v102 = vld [vmem:[%s1 + $0x70] sm:$0xff]
    %v103 = vld [vmem:[%s1 + $0x78] sm:$0xff]
    %v104 = vld [vmem:[%s1 + $0x80] sm:$0xff]
    %v105 = vld [vmem:[%s1 + $0x88] sm:$0xff]
    %v106 = vld [vmem:[%s1 + $0x90] sm:$0xff]
    %v107 = vld [vmem:[%s1 + $0x98] sm:$0xff]
    %v108 = vld [vmem:[%s1 + $0xa0] sm:$0xff]
    %v109 = vld [vmem:[%s1 + $0xa8] sm:$0xff]
    %v110 = vld [vmem:[%s1 + $0xb0] sm:$0xff]
    %v111 = vld [vmem:[%s1 + $0xb8] sm:$0xff]
    %v112 = vld [vmem:[%s1 + $0xc0] sm:$0xff]
    %v113 = vld [vmem:[%s1 + $0xc8] sm:$0xff]
    %v114 = vld [vmem:[%s1 + $0xd0] sm:$0xff]
    %v115 = vld [vmem:[%s1 + $0xd8] sm:$0xff]
    %v116 = vld [vmem:[%s1 + $0xe0] sm:$0xff]
    %v117 = vld [vmem:[%s1 + $0xe8] sm:$0xff]
    %v118 = vld [vmem:[%s1 + $0xf0] sm:$0xff]
    %v119 = vld [vmem:[%s1 + $0xf8] sm:$0xff]
    %v120 = vpack.c.bf16 %v89, %v88
    %v121 = vpack.c.bf16 %v91, %v90
    %v122 = vpack.c.bf16 %v93, %v92
    %v123 = vpack.c.bf16 %v95, %v94
    %v124 = vpack.c.bf16 %v97, %v96
    %v125 = vpack.c.bf16 %v99, %v98
    %v126 = vpack.c.bf16 %v101, %v100
    %v127 = vpack.c.bf16 %v103, %v102
    %v128 = vpack.c.bf16 %v105, %v104
    %v129 = vpack.c.bf16 %v107, %v106
    %v130 = vpack.c.bf16 %v109, %v108
    %v131 = vpack.c.bf16 %v111, %v110
    %v132 = vpack.c.bf16 %v113, %v112
    %v133 = vpack.c.bf16 %v115, %v114
    %v134 = vpack.c.bf16 %v117, %v116
    %v135 = vpack.c.bf16 %v119, %v118
    %v136 = vld [vmem:[%s2] sm:$0xf]
    %v137 = vld [vmem:[%s2 + $0x4] sm:$0xf]
    %v138 = vld [vmem:[%s2 + $0x8] sm:$0xf]
    %v139 = vld [vmem:[%s2 + $0xc] sm:$0xf]
    %v140 = vld [vmem:[%s2 + $0x10] sm:$0xf]
    %v141 = vld [vmem:[%s2 + $0x14] sm:$0xf]
    %v142 = vld [vmem:[%s3] sm:$0xf]
    %v143 = vld [vmem:[%s3 + $0x4] sm:$0xf]
    %v146 = vunpack.c.l.b16 %v142
    %v147 = vunpack.c.l.b16 %v143
    %v148 = vpack.c.b16 %v147, %v146
    %vm150 = vcmask 130048
    %v152 = vsel %vm150, %v120, 0
    %v155 = vsel %vm150, %v121, 0
    %v158 = vsel %vm150, %v122, 0
    %v161 = vsel %vm150, %v123, 0
    %v164 = vsel %vm150, %v124, 0
    %v167 = vsel %vm150, %v125, 0
    %v170 = vsel %vm150, %v126, 0
    %v173 = vsel %vm150, %v127, 0
    %v176 = vsel %vm150, %v128, 0
    %v179 = vsel %vm150, %v129, 0
    %v182 = vsel %vm150, %v130, 0
    %v185 = vsel %vm150, %v131, 0
    %v188 = vsel %vm150, %v132, 0
    %v191 = vsel %vm150, %v133, 0
    %v194 = vsel %vm150, %v134, 0
    %v197 = vsel %vm150, %v135, 0
    %199 = vmatprep.subr.bf16.mxu0 0
    %200 = vmatpush1.bf16.msra.mxu0 0
    %201 = vmatprep.subr.bf16.mxu0 0
    %202 = vmatpush1.bf16.msra.mxu0 0
    %203 = vmatprep.subr.bf16.mxu0 0
    %204 = vmatpush1.bf16.msra.mxu0 0
    %205 = vmatprep.subr.bf16.mxu0 0
    %206 = vmatpush1.bf16.msra.mxu0 0
    %207 = vmatprep.subr.bf16.mxu0 0
    %208 = vmatpush1.bf16.msra.mxu0 0
    %209 = vmatprep.subr.bf16.mxu0 0
    %210 = vmatpush1.bf16.msra.mxu0 0
    %211 = vmatprep.subr.bf16.mxu0 0
    %212 = vmatpush1.bf16.msra.mxu0 0
    %213 = vmatprep.subr.bf16.mxu0 0
    %214 = vmatpush1.bf16.msra.mxu0 %v148
    %215 = vmatprep.subr.bf16.mxu0 0
    %216 = vmatpush2.bf16.msra.mxu0 0
    %217 = vmatprep.subr.bf16.mxu0 0
    %218 = vmatpush2.bf16.msra.mxu0 0
    %219 = vmatprep.subr.bf16.mxu0 0
    %220 = vmatpush2.bf16.msra.mxu0 0
    %221 = vmatprep.subr.bf16.mxu0 0
    %222 = vmatpush2.bf16.msra.mxu0 0
    %223 = vmatprep.subr.bf16.mxu0 0
    %224 = vmatpush2.bf16.msra.mxu0 0
    %225 = vmatprep.subr.bf16.mxu0 0
    %226 = vmatpush2.bf16.msra.mxu0 0
    %227 = vmatprep.subr.bf16.mxu0 0
    %228 = vmatpush2.bf16.msra.mxu0 0
    %229 = vmatprep.subr.bf16.mxu0 0
    %230 = vmatpush2.bf16.msra.mxu0 0
    %231 = vmatprep.mubr.bf16.mxu0 0
    %232 = vmatmul.mubr.bf16.gmra.mxu0 %v152
    %v233 = vpop.f32.mrf.mxu0
    %v234 = vadd.f32 0.0, %v233
    %v235 = vpop.f32.mrf.mxu0
    %v236 = vpop.f32.mrf.mxu0
    %v237 = vadd.f32 0.0, %v236
    %v238 = vpop.f32.mrf.mxu0
    %239 = vmatprep.mubr.bf16.mxu0 0
    %240 = vmatmul.mubr.bf16.gmra.mxu0 %v155
    %v241 = vpop.f32.mrf.mxu0
    %v242 = vadd.f32 0.0, %v241
    %v243 = vpop.f32.mrf.mxu0
    %v244 = vpop.f32.mrf.mxu0
    %v245 = vadd.f32 0.0, %v244
    %v246 = vpop.f32.mrf.mxu0
    %247 = vmatprep.mubr.bf16.mxu0 0
    %248 = vmatmul.mubr.bf16.gmra.mxu0 %v158
    %v249 = vpop.f32.mrf.mxu0
    %v250 = vadd.f32 0.0, %v249
    %v251 = vpop.f32.mrf.mxu0
    %v252 = vpop.f32.mrf.mxu0
    %v253 = vadd.f32 0.0, %v252
    %v254 = vpop.f32.mrf.mxu0
    %255 = vmatprep.mubr.bf16.mxu0 0
    %256 = vmatmul.mubr.bf16.gmra.mxu0 %v161
    %v257 = vpop.f32.mrf.mxu0
    %v258 = vadd.f32 0.0, %v257
    %v259 = vpop.f32.mrf.mxu0
    %v260 = vpop.f32.mrf.mxu0
    %v261 = vadd.f32 0.0, %v260
    %v262 = vpop.f32.mrf.mxu0
    %263 = vmatprep.mubr.bf16.mxu0 0
    %264 = vmatmul.mubr.bf16.gmra.mxu0 %v164
    %v265 = vpop.f32.mrf.mxu0
    %v266 = vadd.f32 0.0, %v265
    %v267 = vpop.f32.mrf.mxu0
    %v268 = vpop.f32.mrf.mxu0
    %v269 = vadd.f32 0.0, %v268
    %v270 = vpop.f32.mrf.mxu0
    %271 = vmatprep.mubr.bf16.mxu0 0
    %272 = vmatmul.mubr.bf16.gmra.mxu0 %v167
    %v273 = vpop.f32.mrf.mxu0
    %v274 = vadd.f32 0.0, %v273
    %v275 = vpop.f32.mrf.mxu0
    %v276 = vpop.f32.mrf.mxu0
    %v277 = vadd.f32 0.0, %v276
    %v278 = vpop.f32.mrf.mxu0
    %279 = vmatprep.mubr.bf16.mxu0 0
    %280 = vmatmul.mubr.bf16.gmra.mxu0 %v170
    %v281 = vpop.f32.mrf.mxu0
    %v282 = vadd.f32 0.0, %v281
    %v283 = vpop.f32.mrf.mxu0
    %v284 = vpop.f32.mrf.mxu0
    %v285 = vadd.f32 0.0, %v284
    %v286 = vpop.f32.mrf.mxu0
    %287 = vmatprep.mubr.bf16.mxu0 0
    %288 = vmatmul.mubr.bf16.gmra.mxu0 %v173
    %v289 = vpop.f32.mrf.mxu0
    %v290 = vadd.f32 0.0, %v289
    %v291 = vpop.f32.mrf.mxu0
    %v292 = vpop.f32.mrf.mxu0
    %v293 = vadd.f32 0.0, %v292
    %v294 = vpop.f32.mrf.mxu0
    %295 = vmatprep.mubr.bf16.mxu0 0
    %296 = vmatmul.mubr.bf16.gmra.mxu0 %v176
    %v297 = vpop.f32.mrf.mxu0
    %v298 = vadd.f32 0.0, %v297
    %v299 = vpop.f32.mrf.mxu0
    %v300 = vpop.f32.mrf.mxu0
    %v301 = vadd.f32 0.0, %v300
    %v302 = vpop.f32.mrf.mxu0
    %303 = vmatprep.mubr.bf16.mxu0 0
    %304 = vmatmul.mubr.bf16.gmra.mxu0 %v179
    %v305 = vpop.f32.mrf.mxu0
    %v306 = vadd.f32 0.0, %v305
    %v307 = vpop.f32.mrf.mxu0
    %v308 = vpop.f32.mrf.mxu0
    %v309 = vadd.f32 0.0, %v308
    %v310 = vpop.f32.mrf.mxu0
    %311 = vmatprep.mubr.bf16.mxu0 0
    %312 = vmatmul.mubr.bf16.gmra.mxu0 %v182
    %v313 = vpop.f32.mrf.mxu0
    %v314 = vadd.f32 0.0, %v313
    %v315 = vpop.f32.mrf.mxu0
    %v316 = vpop.f32.mrf.mxu0
    %v317 = vadd.f32 0.0, %v316
    %v318 = vpop.f32.mrf.mxu0
    %319 = vmatprep.mubr.bf16.mxu0 0
    %320 = vmatmul.mubr.bf16.gmra.mxu0 %v185
    %v321 = vpop.f32.mrf.mxu0
    %v322 = vadd.f32 0.0, %v321
    %v323 = vpop.f32.mrf.mxu0
    %v324 = vpop.f32.mrf.mxu0
    %v325 = vadd.f32 0.0, %v324
    %v326 = vpop.f32.mrf.mxu0
    %327 = vmatprep.mubr.bf16.mxu0 0
    %328 = vmatmul.mubr.bf16.gmra.mxu0 %v188
    %v329 = vpop.f32.mrf.mxu0
    %v330 = vadd.f32 0.0, %v329
    %v331 = vpop.f32.mrf.mxu0
    %v332 = vpop.f32.mrf.mxu0
    %v333 = vadd.f32 0.0, %v332
    %v334 = vpop.f32.mrf.mxu0
    %335 = vmatprep.mubr.bf16.mxu0 0
    %336 = vmatmul.mubr.bf16.gmra.mxu0 %v191
    %v337 = vpop.f32.mrf.mxu0
    %v338 = vadd.f32 0.0, %v337
    %v339 = vpop.f32.mrf.mxu0
    %v340 = vpop.f32.mrf.mxu0
    %v341 = vadd.f32 0.0, %v340
    %v342 = vpop.f32.mrf.mxu0
    %343 = vmatprep.mubr.bf16.mxu0 0
    %344 = vmatmul.mubr.bf16.gmra.mxu0 %v194
    %v345 = vpop.f32.mrf.mxu0
    %v346 = vadd.f32 0.0, %v345
    %v347 = vpop.f32.mrf.mxu0
    %v348 = vpop.f32.mrf.mxu0
    %v349 = vadd.f32 0.0, %v348
    %v350 = vpop.f32.mrf.mxu0
    %351 = vmatprep.mubr.bf16.mxu0 0
    %352 = vmatmul.mubr.bf16.gmra.mxu0 %v197
    %v353 = vpop.f32.mrf.mxu0
    %v354 = vadd.f32 0.0, %v353
    %v355 = vpop.f32.mrf.mxu0
    %v356 = vpop.f32.mrf.mxu0
    %v357 = vadd.f32 0.0, %v356
    %v358 = vpop.f32.mrf.mxu0
    %359 = vdwg.mxu0
    %v366 = vunpack.c.l.b16 %v136
    %v367 = vunpack.c.l.b16 %v137
    %v368 = vunpack.c.l.b16 %v138
    %v369 = vunpack.c.l.b16 %v139
    %v370 = vunpack.c.l.b16 %v140
    %v371 = vunpack.c.l.b16 %v141
    %v372 = vpack.c.b16 %v367, %v366
    %v373 = vpack.c.b16 %v369, %v368
    %v374 = vpack.c.b16 %v371, %v370
    %vm378 = vcmask 392192
    %v380 = vsel %vm378, %v72, 0
    %v383 = vsel %vm378, %v73, 0
    %v386 = vsel %vm378, %v74, 0
    %v389 = vsel %vm378, %v75, 0
    %v392 = vsel %vm378, %v76, 0
    %v395 = vsel %vm378, %v77, 0
    %v398 = vsel %vm378, %v78, 0
    %v401 = vsel %vm378, %v79, 0
    %v404 = vsel %vm378, %v80, 0
    %v407 = vsel %vm378, %v81, 0
    %v410 = vsel %vm378, %v82, 0
    %v413 = vsel %vm378, %v83, 0
    %v416 = vsel %vm378, %v84, 0
    %v419 = vsel %vm378, %v85, 0
    %v422 = vsel %vm378, %v86, 0
    %v425 = vsel %vm378, %v87, 0
    %427 = vmatprep.subr.bf16.mxu0 0
    %428 = vmatpush1.bf16.msra.mxu0 0
    %429 = vmatprep.subr.bf16.mxu0 0
    %430 = vmatpush1.bf16.msra.mxu0 0
    %431 = vmatprep.subr.bf16.mxu0 0
    %432 = vmatpush1.bf16.msra.mxu0 0
    %433 = vmatprep.subr.bf16.mxu0 0
    %434 = vmatpush1.bf16.msra.mxu0 0
    %435 = vmatprep.subr.bf16.mxu0 0
    %436 = vmatpush1.bf16.msra.mxu0 0
    %437 = vmatprep.subr.bf16.mxu0 0
    %438 = vmatpush1.bf16.msra.mxu0 %v374
    %439 = vmatprep.subr.bf16.mxu0 0
    %440 = vmatpush1.bf16.msra.mxu0 %v373
    %441 = vmatprep.subr.bf16.mxu0 0
    %442 = vmatpush1.bf16.msra.mxu0 %v372
    %443 = vmatprep.subr.bf16.mxu0 0
    %444 = vmatpush2.bf16.msra.mxu0 0
    %445 = vmatprep.subr.bf16.mxu0 0
    %446 = vmatpush2.bf16.msra.mxu0 0
    %447 = vmatprep.subr.bf16.mxu0 0
    %448 = vmatpush2.bf16.msra.mxu0 0
    %449 = vmatprep.subr.bf16.mxu0 0
    %450 = vmatpush2.bf16.msra.mxu0 0
    %451 = vmatprep.subr.bf16.mxu0 0
    %452 = vmatpush2.bf16.msra.mxu0 0
    %453 = vmatprep.subr.bf16.mxu0 0
    %454 = vmatpush2.bf16.msra.mxu0 0
    %455 = vmatprep.subr.bf16.mxu0 0
    %456 = vmatpush2.bf16.msra.mxu0 0
    %457 = vmatprep.subr.bf16.mxu0 0
    %458 = vmatpush2.bf16.msra.mxu0 0
    %459 = vmatprep.mubr.bf16.mxu0 0
    %460 = vmatmul.mubr.bf16.gmra.mxu0 %v380
    %v461 = vpop.f32.mrf.mxu0
    %v462 = vadd.f32 %v234, %v461
    %v463 = vpop.f32.mrf.mxu0
    %v464 = vpop.f32.mrf.mxu0
    %v465 = vadd.f32 %v237, %v464
    %v466 = vpop.f32.mrf.mxu0
    %467 = vmatprep.mubr.bf16.mxu0 0
    %468 = vmatmul.mubr.bf16.gmra.mxu0 %v383
    %v469 = vpop.f32.mrf.mxu0
    %v470 = vadd.f32 %v242, %v469
    %v471 = vpop.f32.mrf.mxu0
    %v472 = vpop.f32.mrf.mxu0
    %v473 = vadd.f32 %v245, %v472
    %v474 = vpop.f32.mrf.mxu0
    %475 = vmatprep.mubr.bf16.mxu0 0
    %476 = vmatmul.mubr.bf16.gmra.mxu0 %v386
    %v477 = vpop.f32.mrf.mxu0
    %v478 = vadd.f32 %v250, %v477
    %v479 = vpop.f32.mrf.mxu0
    %v480 = vpop.f32.mrf.mxu0
    %v481 = vadd.f32 %v253, %v480
    %v482 = vpop.f32.mrf.mxu0
    %483 = vmatprep.mubr.bf16.mxu0 0
    %484 = vmatmul.mubr.bf16.gmra.mxu0 %v389
    %v485 = vpop.f32.mrf.mxu0
    %v486 = vadd.f32 %v258, %v485
    %v487 = vpop.f32.mrf.mxu0
    %v488 = vpop.f32.mrf.mxu0
    %v489 = vadd.f32 %v261, %v488
    %v490 = vpop.f32.mrf.mxu0
    %491 = vmatprep.mubr.bf16.mxu0 0
    %492 = vmatmul.mubr.bf16.gmra.mxu0 %v392
    %v493 = vpop.f32.mrf.mxu0
    %v494 = vadd.f32 %v266, %v493
    %v495 = vpop.f32.mrf.mxu0
    %v496 = vpop.f32.mrf.mxu0
    %v497 = vadd.f32 %v269, %v496
    %v498 = vpop.f32.mrf.mxu0
    %499 = vmatprep.mubr.bf16.mxu0 0
    %500 = vmatmul.mubr.bf16.gmra.mxu0 %v395
    %v501 = vpop.f32.mrf.mxu0
    %v502 = vadd.f32 %v274, %v501
    %v503 = vpop.f32.mrf.mxu0
    %v504 = vpop.f32.mrf.mxu0
    %v505 = vadd.f32 %v277, %v504
    %v506 = vpop.f32.mrf.mxu0
    %507 = vmatprep.mubr.bf16.mxu0 0
    %508 = vmatmul.mubr.bf16.gmra.mxu0 %v398
    %v509 = vpop.f32.mrf.mxu0
    %v510 = vadd.f32 %v282, %v509
    %v511 = vpop.f32.mrf.mxu0
    %v512 = vpop.f32.mrf.mxu0
    %v513 = vadd.f32 %v285, %v512
    %v514 = vpop.f32.mrf.mxu0
    %515 = vmatprep.mubr.bf16.mxu0 0
    %516 = vmatmul.mubr.bf16.gmra.mxu0 %v401
    %v517 = vpop.f32.mrf.mxu0
    %v518 = vadd.f32 %v290, %v517
    %v519 = vpop.f32.mrf.mxu0
    %v520 = vpop.f32.mrf.mxu0
    %v521 = vadd.f32 %v293, %v520
    %v522 = vpop.f32.mrf.mxu0
    %523 = vmatprep.mubr.bf16.mxu0 0
    %524 = vmatmul.mubr.bf16.gmra.mxu0 %v404
    %v525 = vpop.f32.mrf.mxu0
    %v526 = vadd.f32 %v298, %v525
    %v527 = vpop.f32.mrf.mxu0
    %v528 = vpop.f32.mrf.mxu0
    %v529 = vadd.f32 %v301, %v528
    %v530 = vpop.f32.mrf.mxu0
    %531 = vmatprep.mubr.bf16.mxu0 0
    %532 = vmatmul.mubr.bf16.gmra.mxu0 %v407
    %v533 = vpop.f32.mrf.mxu0
    %v534 = vadd.f32 %v306, %v533
    %v535 = vpop.f32.mrf.mxu0
    %v536 = vpop.f32.mrf.mxu0
    %v537 = vadd.f32 %v309, %v536
    %v538 = vpop.f32.mrf.mxu0
    %539 = vmatprep.mubr.bf16.mxu0 0
    %540 = vmatmul.mubr.bf16.gmra.mxu0 %v410
    %v541 = vpop.f32.mrf.mxu0
    %v542 = vadd.f32 %v314, %v541
    %v543 = vpop.f32.mrf.mxu0
    %v544 = vpop.f32.mrf.mxu0
    %v545 = vadd.f32 %v317, %v544
    %v546 = vpop.f32.mrf.mxu0
    %547 = vmatprep.mubr.bf16.mxu0 0
    %548 = vmatmul.mubr.bf16.gmra.mxu0 %v413
    %v549 = vpop.f32.mrf.mxu0
    %v550 = vadd.f32 %v322, %v549
    %v551 = vpop.f32.mrf.mxu0
    %v552 = vpop.f32.mrf.mxu0
    %v553 = vadd.f32 %v325, %v552
    %v554 = vpop.f32.mrf.mxu0
    %555 = vmatprep.mubr.bf16.mxu0 0
    %556 = vmatmul.mubr.bf16.gmra.mxu0 %v416
    %v557 = vpop.f32.mrf.mxu0
    %v558 = vadd.f32 %v330, %v557
    %v559 = vpop.f32.mrf.mxu0
    %v560 = vpop.f32.mrf.mxu0
    %v561 = vadd.f32 %v333, %v560
    %v562 = vpop.f32.mrf.mxu0
    %563 = vmatprep.mubr.bf16.mxu0 0
    %564 = vmatmul.mubr.bf16.gmra.mxu0 %v419
    %v565 = vpop.f32.mrf.mxu0
    %v566 = vadd.f32 %v338, %v565
    %v567 = vpop.f32.mrf.mxu0
    %v568 = vpop.f32.mrf.mxu0
    %v569 = vadd.f32 %v341, %v568
    %v570 = vpop.f32.mrf.mxu0
    %571 = vmatprep.mubr.bf16.mxu0 0
    %572 = vmatmul.mubr.bf16.gmra.mxu0 %v422
    %v573 = vpop.f32.mrf.mxu0
    %v574 = vadd.f32 %v346, %v573
    %v575 = vpop.f32.mrf.mxu0
    %v576 = vpop.f32.mrf.mxu0
    %v577 = vadd.f32 %v349, %v576
    %v578 = vpop.f32.mrf.mxu0
    %579 = vmatprep.mubr.bf16.mxu0 0
    %580 = vmatmul.mubr.bf16.gmra.mxu0 %v425
    %v581 = vpop.f32.mrf.mxu0
    %v582 = vadd.f32 %v354, %v581
    %v583 = vpop.f32.mrf.mxu0
    %v584 = vpop.f32.mrf.mxu0
    %v585 = vadd.f32 %v357, %v584
    %v586 = vpop.f32.mrf.mxu0
    %587 = vdwg.mxu0
    %v588 = vld [vmem:[%s4] sm:$0x1]
    %v590 = vlaneseq
    %v591 = vshrl.u32 %v590, 7
    %v592 = vsub.s32 0, %v591
    %v593 = vrot.slane %v588, %v592
    %v595 = vadd.f32 %v462, %v593
    %v596 = vadd.f32 %v465, %v593
    %v597 = vadd.f32 %v470, %v593
    %v598 = vadd.f32 %v473, %v593
    %v599 = vadd.f32 %v478, %v593
    %v600 = vadd.f32 %v481, %v593
    %v601 = vadd.f32 %v486, %v593
    %v602 = vadd.f32 %v489, %v593
    %v603 = vadd.f32 %v494, %v593
    %v604 = vadd.f32 %v497, %v593
    %v605 = vadd.f32 %v502, %v593
    %v606 = vadd.f32 %v505, %v593
    %v607 = vadd.f32 %v510, %v593
    %v608 = vadd.f32 %v513, %v593
    %v609 = vadd.f32 %v518, %v593
    %v610 = vadd.f32 %v521, %v593
    %v611 = vadd.f32 %v526, %v593
    %v612 = vadd.f32 %v529, %v593
    %v613 = vadd.f32 %v534, %v593
    %v614 = vadd.f32 %v537, %v593
    %v615 = vadd.f32 %v542, %v593
    %v616 = vadd.f32 %v545, %v593
    %v617 = vadd.f32 %v550, %v593
    %v618 = vadd.f32 %v553, %v593
    %v619 = vadd.f32 %v558, %v593
    %v620 = vadd.f32 %v561, %v593
    %v621 = vadd.f32 %v566, %v593
    %v622 = vadd.f32 %v569, %v593
    %v623 = vadd.f32 %v574, %v593
    %v624 = vadd.f32 %v577, %v593
    %v625 = vadd.f32 %v582, %v593
    %v626 = vadd.f32 %v585, %v593
    %v627 = vmax.f32 %v595, 0.0
    %v628 = vmax.f32 %v596, 0.0
    %v629 = vmax.f32 %v597, 0.0
    %v630 = vmax.f32 %v598, 0.0
    %v631 = vmax.f32 %v599, 0.0
    %v632 = vmax.f32 %v600, 0.0
    %v633 = vmax.f32 %v601, 0.0
    %v634 = vmax.f32 %v602, 0.0
    %v635 = vmax.f32 %v603, 0.0
    %v636 = vmax.f32 %v604, 0.0
    %v637 = vmax.f32 %v605, 0.0
    %v638 = vmax.f32 %v606, 0.0
    %v639 = vmax.f32 %v607, 0.0
    %v640 = vmax.f32 %v608, 0.0
    %v641 = vmax.f32 %v609, 0.0
    %v642 = vmax.f32 %v610, 0.0
    %v643 = vmax.f32 %v611, 0.0
    %v644 = vmax.f32 %v612, 0.0
    %v645 = vmax.f32 %v613, 0.0
    %v646 = vmax.f32 %v614, 0.0
    %v647 = vmax.f32 %v615, 0.0
    %v648 = vmax.f32 %v616, 0.0
    %v649 = vmax.f32 %v617, 0.0
    %v650 = vmax.f32 %v618, 0.0
    %v651 = vmax.f32 %v619, 0.0
    %v652 = vmax.f32 %v620, 0.0
    %v653 = vmax.f32 %v621, 0.0
    %v654 = vmax.f32 %v622, 0.0
    %v655 = vmax.f32 %v623, 0.0
    %v656 = vmax.f32 %v624, 0.0
    %v657 = vmax.f32 %v625, 0.0
    %v658 = vmax.f32 %v626, 0.0
    %v659 = vpack.c.bf16 %v628, %v627
    %v660 = vpack.c.bf16 %v630, %v629
    %v661 = vpack.c.bf16 %v632, %v631
    %v662 = vpack.c.bf16 %v634, %v633
    %v663 = vpack.c.bf16 %v636, %v635
    %v664 = vpack.c.bf16 %v638, %v637
    %v665 = vpack.c.bf16 %v640, %v639
    %v666 = vpack.c.bf16 %v642, %v641
    %v667 = vpack.c.bf16 %v644, %v643
    %v668 = vpack.c.bf16 %v646, %v645
    %v669 = vpack.c.bf16 %v648, %v647
    %v670 = vpack.c.bf16 %v650, %v649
    %v671 = vpack.c.bf16 %v652, %v651
    %v672 = vpack.c.bf16 %v654, %v653
    %v673 = vpack.c.bf16 %v656, %v655
    %v674 = vpack.c.bf16 %v658, %v657
    %v675 = vld [vmem:[%s5] sm:$0xf]
    %v676 = vld [vmem:[%s5 + $0x4] sm:$0xf]
    %v677 = vld [vmem:[%s5 + $0x8] sm:$0xf]
    %v678 = vld [vmem:[%s5 + $0xc] sm:$0xf]
    %v679 = vld [vmem:[%s5 + $0x10] sm:$0xf]
    %v680 = vld [vmem:[%s5 + $0x14] sm:$0xf]
    %v681 = vld [vmem:[%s5 + $0x18] sm:$0xf]
    %v682 = vld [vmem:[%s5 + $0x1c] sm:$0xf]
    %v683 = vld [vmem:[%s5 + $0x20] sm:$0xf]
    %v684 = vld [vmem:[%s5 + $0x24] sm:$0xf]
    %v685 = vld [vmem:[%s5 + $0x28] sm:$0xf]
    %v686 = vld [vmem:[%s5 + $0x2c] sm:$0xf]
    %v687 = vld [vmem:[%s5 + $0x30] sm:$0xf]
    %v688 = vld [vmem:[%s5 + $0x34] sm:$0xf]
    %v689 = vld [vmem:[%s5 + $0x38] sm:$0xf]
    %v690 = vld [vmem:[%s5 + $0x3c] sm:$0xf]
    %v691 = vld [vmem:[%s6] sm:$0x1]
    %v693 = vlaneseq
    %v694 = vshrl.u32 %v693, 7
    %v695 = vsub.s32 0, %v694
    %v696 = vrot.slane %v691, %v695
    %v714 = vunpack.c.l.b16 %v675
    %v715 = vunpack.c.l.b16 %v676
    %v716 = vunpack.c.l.b16 %v677
    %v717 = vunpack.c.l.b16 %v678
    %v718 = vunpack.c.l.b16 %v679
    %v719 = vunpack.c.l.b16 %v680
    %v720 = vunpack.c.l.b16 %v681
    %v721 = vunpack.c.l.b16 %v682
    %v722 = vunpack.c.l.b16 %v683
    %v723 = vunpack.c.l.b16 %v684
    %v724 = vunpack.c.l.b16 %v685
    %v725 = vunpack.c.l.b16 %v686
    %v726 = vunpack.c.l.b16 %v687
    %v727 = vunpack.c.l.b16 %v688
    %v728 = vunpack.c.l.b16 %v689
    %v729 = vunpack.c.l.b16 %v690
    %v730 = vpack.c.b16 %v715, %v714
    %v731 = vpack.c.b16 %v717, %v716
    %v732 = vpack.c.b16 %v719, %v718
    %v733 = vpack.c.b16 %v721, %v720
    %v734 = vpack.c.b16 %v723, %v722
    %v735 = vpack.c.b16 %v725, %v724
    %v736 = vpack.c.b16 %v727, %v726
    %v737 = vpack.c.b16 %v729, %v728
    %746 = vmatprep.subr.bf16.mxu0 0
    %747 = vmatpush1.bf16.msra.mxu0 %v737
    %748 = vmatprep.subr.bf16.mxu0 0
    %749 = vmatpush1.bf16.msra.mxu0 %v736
    %750 = vmatprep.subr.bf16.mxu0 0
    %751 = vmatpush1.bf16.msra.mxu0 %v735
    %752 = vmatprep.subr.bf16.mxu0 0
    %753 = vmatpush1.bf16.msra.mxu0 %v734
    %754 = vmatprep.subr.bf16.mxu0 0
    %755 = vmatpush1.bf16.msra.mxu0 %v733
    %756 = vmatprep.subr.bf16.mxu0 0
    %757 = vmatpush1.bf16.msra.mxu0 %v732
    %758 = vmatprep.subr.bf16.mxu0 0
    %759 = vmatpush1.bf16.msra.mxu0 %v731
    %760 = vmatprep.subr.bf16.mxu0 0
    %761 = vmatpush1.bf16.msra.mxu0 %v730
    %762 = vmatprep.subr.bf16.mxu0 0
    %763 = vmatpush2.bf16.msra.mxu0 0
    %764 = vmatprep.subr.bf16.mxu0 0
    %765 = vmatpush2.bf16.msra.mxu0 0
    %766 = vmatprep.subr.bf16.mxu0 0
    %767 = vmatpush2.bf16.msra.mxu0 0
    %768 = vmatprep.subr.bf16.mxu0 0
    %769 = vmatpush2.bf16.msra.mxu0 0
    %770 = vmatprep.subr.bf16.mxu0 0
    %771 = vmatpush2.bf16.msra.mxu0 0
    %772 = vmatprep.subr.bf16.mxu0 0
    %773 = vmatpush2.bf16.msra.mxu0 0
    %774 = vmatprep.subr.bf16.mxu0 0
    %775 = vmatpush2.bf16.msra.mxu0 0
    %776 = vmatprep.subr.bf16.mxu0 0
    %777 = vmatpush2.bf16.msra.mxu0 0
    %778 = vmatprep.mubr.bf16.mxu0 0
    %779 = vmatmul.mubr.bf16.gmra.mxu0 %v659
    %v780 = vpop.f32.mrf.mxu0
    %v781 = vadd.f32 %v696, %v780
    %v782 = vpop.f32.mrf.mxu0
    %v783 = vpop.f32.mrf.mxu0
    %v784 = vadd.f32 %v696, %v783
    %v785 = vpop.f32.mrf.mxu0
    %786 = vmatprep.mubr.bf16.mxu0 0
    %787 = vmatmul.mubr.bf16.gmra.mxu0 %v660
    %v788 = vpop.f32.mrf.mxu0
    %v789 = vadd.f32 %v696, %v788
    %v790 = vpop.f32.mrf.mxu0
    %v791 = vpop.f32.mrf.mxu0
    %v792 = vadd.f32 %v696, %v791
    %v793 = vpop.f32.mrf.mxu0
    %794 = vmatprep.mubr.bf16.mxu0 0
    %795 = vmatmul.mubr.bf16.gmra.mxu0 %v661
    %v796 = vpop.f32.mrf.mxu0
    %v797 = vadd.f32 %v696, %v796
    %v798 = vpop.f32.mrf.mxu0
    %v799 = vpop.f32.mrf.mxu0
    %v800 = vadd.f32 %v696, %v799
    %v801 = vpop.f32.mrf.mxu0
    %802 = vmatprep.mubr.bf16.mxu0 0
    %803 = vmatmul.mubr.bf16.gmra.mxu0 %v662
    %v804 = vpop.f32.mrf.mxu0
    %v805 = vadd.f32 %v696, %v804
    %v806 = vpop.f32.mrf.mxu0
    %v807 = vpop.f32.mrf.mxu0
    %v808 = vadd.f32 %v696, %v807
    %v809 = vpop.f32.mrf.mxu0
    %810 = vmatprep.mubr.bf16.mxu0 0
    %811 = vmatmul.mubr.bf16.gmra.mxu0 %v663
    %v812 = vpop.f32.mrf.mxu0
    %v813 = vadd.f32 %v696, %v812
    %v814 = vpop.f32.mrf.mxu0
    %v815 = vpop.f32.mrf.mxu0
    %v816 = vadd.f32 %v696, %v815
    %v817 = vpop.f32.mrf.mxu0
    %818 = vmatprep.mubr.bf16.mxu0 0
    %819 = vmatmul.mubr.bf16.gmra.mxu0 %v664
    %v820 = vpop.f32.mrf.mxu0
    %v821 = vadd.f32 %v696, %v820
    %v822 = vpop.f32.mrf.mxu0
    %v823 = vpop.f32.mrf.mxu0
    %v824 = vadd.f32 %v696, %v823
    %v825 = vpop.f32.mrf.mxu0
    %826 = vmatprep.mubr.bf16.mxu0 0
    %827 = vmatmul.mubr.bf16.gmra.mxu0 %v665
    %v828 = vpop.f32.mrf.mxu0
    %v829 = vadd.f32 %v696, %v828
    %v830 = vpop.f32.mrf.mxu0
    %v831 = vpop.f32.mrf.mxu0
    %v832 = vadd.f32 %v696, %v831
    %v833 = vpop.f32.mrf.mxu0
    %834 = vmatprep.mubr.bf16.mxu0 0
    %835 = vmatmul.mubr.bf16.gmra.mxu0 %v666
    %v836 = vpop.f32.mrf.mxu0
    %v837 = vadd.f32 %v696, %v836
    %v838 = vpop.f32.mrf.mxu0
    %v839 = vpop.f32.mrf.mxu0
    %v840 = vadd.f32 %v696, %v839
    %v841 = vpop.f32.mrf.mxu0
    %842 = vmatprep.mubr.bf16.mxu0 0
    %843 = vmatmul.mubr.bf16.gmra.mxu0 %v667
    %v844 = vpop.f32.mrf.mxu0
    %v845 = vadd.f32 %v696, %v844
    %v846 = vpop.f32.mrf.mxu0
    %v847 = vpop.f32.mrf.mxu0
    %v848 = vadd.f32 %v696, %v847
    %v849 = vpop.f32.mrf.mxu0
    %850 = vmatprep.mubr.bf16.mxu0 0
    %851 = vmatmul.mubr.bf16.gmra.mxu0 %v668
    %v852 = vpop.f32.mrf.mxu0
    %v853 = vadd.f32 %v696, %v852
    %v854 = vpop.f32.mrf.mxu0
    %v855 = vpop.f32.mrf.mxu0
    %v856 = vadd.f32 %v696, %v855
    %v857 = vpop.f32.mrf.mxu0
    %858 = vmatprep.mubr.bf16.mxu0 0
    %859 = vmatmul.mubr.bf16.gmra.mxu0 %v669
    %v860 = vpop.f32.mrf.mxu0
    %v861 = vadd.f32 %v696, %v860
    %v862 = vpop.f32.mrf.mxu0
    %v863 = vpop.f32.mrf.mxu0
    %v864 = vadd.f32 %v696, %v863
    %v865 = vpop.f32.mrf.mxu0
    %866 = vmatprep.mubr.bf16.mxu0 0
    %867 = vmatmul.mubr.bf16.gmra.mxu0 %v670
    %v868 = vpop.f32.mrf.mxu0
    %v869 = vadd.f32 %v696, %v868
    %v870 = vpop.f32.mrf.mxu0
    %v871 = vpop.f32.mrf.mxu0
    %v872 = vadd.f32 %v696, %v871
    %v873 = vpop.f32.mrf.mxu0
    %874 = vmatprep.mubr.bf16.mxu0 0
    %875 = vmatmul.mubr.bf16.gmra.mxu0 %v671
    %v876 = vpop.f32.mrf.mxu0
    %v877 = vadd.f32 %v696, %v876
    %v878 = vpop.f32.mrf.mxu0
    %v879 = vpop.f32.mrf.mxu0
    %v880 = vadd.f32 %v696, %v879
    %v881 = vpop.f32.mrf.mxu0
    %882 = vmatprep.mubr.bf16.mxu0 0
    %883 = vmatmul.mubr.bf16.gmra.mxu0 %v672
    %v884 = vpop.f32.mrf.mxu0
    %v885 = vadd.f32 %v696, %v884
    %v886 = vpop.f32.mrf.mxu0
    %v887 = vpop.f32.mrf.mxu0
    %v888 = vadd.f32 %v696, %v887
    %v889 = vpop.f32.mrf.mxu0
    %890 = vmatprep.mubr.bf16.mxu0 0
    %891 = vmatmul.mubr.bf16.gmra.mxu0 %v673
    %v892 = vpop.f32.mrf.mxu0
    %v893 = vadd.f32 %v696, %v892
    %v894 = vpop.f32.mrf.mxu0
    %v895 = vpop.f32.mrf.mxu0
    %v896 = vadd.f32 %v696, %v895
    %v897 = vpop.f32.mrf.mxu0
    %898 = vmatprep.mubr.bf16.mxu0 0
    %899 = vmatmul.mubr.bf16.gmra.mxu0 %v674
    %v900 = vpop.f32.mrf.mxu0
    %v901 = vadd.f32 %v696, %v900
    %v902 = vpop.f32.mrf.mxu0
    %v903 = vpop.f32.mrf.mxu0
    %v904 = vadd.f32 %v696, %v903
    %v905 = vpop.f32.mrf.mxu0
    %906 = vdwg.mxu0
    %v907 = vmax.f32 %v781, 0.0
    %v908 = vmax.f32 %v784, 0.0
    %v909 = vmax.f32 %v789, 0.0
    %v910 = vmax.f32 %v792, 0.0
    %v911 = vmax.f32 %v797, 0.0
    %v912 = vmax.f32 %v800, 0.0
    %v913 = vmax.f32 %v805, 0.0
    %v914 = vmax.f32 %v808, 0.0
    %v915 = vmax.f32 %v813, 0.0
    %v916 = vmax.f32 %v816, 0.0
    %v917 = vmax.f32 %v821, 0.0
    %v918 = vmax.f32 %v824, 0.0
    %v919 = vmax.f32 %v829, 0.0
    %v920 = vmax.f32 %v832, 0.0
    %v921 = vmax.f32 %v837, 0.0
    %v922 = vmax.f32 %v840, 0.0
    %v923 = vmax.f32 %v845, 0.0
    %v924 = vmax.f32 %v848, 0.0
    %v925 = vmax.f32 %v853, 0.0
    %v926 = vmax.f32 %v856, 0.0
    %v927 = vmax.f32 %v861, 0.0
    %v928 = vmax.f32 %v864, 0.0
    %v929 = vmax.f32 %v869, 0.0
    %v930 = vmax.f32 %v872, 0.0
    %v931 = vmax.f32 %v877, 0.0
    %v932 = vmax.f32 %v880, 0.0
    %v933 = vmax.f32 %v885, 0.0
    %v934 = vmax.f32 %v888, 0.0
    %v935 = vmax.f32 %v893, 0.0
    %v936 = vmax.f32 %v896, 0.0
    %v937 = vmax.f32 %v901, 0.0
    %v938 = vmax.f32 %v904, 0.0
    %v939 = vpack.c.bf16 %v908, %v907
    %v940 = vpack.c.bf16 %v910, %v909
    %v941 = vpack.c.bf16 %v912, %v911
    %v942 = vpack.c.bf16 %v914, %v913
    %v943 = vpack.c.bf16 %v916, %v915
    %v944 = vpack.c.bf16 %v918, %v917
    %v945 = vpack.c.bf16 %v920, %v919
    %v946 = vpack.c.bf16 %v922, %v921
    %v947 = vpack.c.bf16 %v924, %v923
    %v948 = vpack.c.bf16 %v926, %v925
    %v949 = vpack.c.bf16 %v928, %v927
    %v950 = vpack.c.bf16 %v930, %v929
    %v951 = vpack.c.bf16 %v932, %v931
    %v952 = vpack.c.bf16 %v934, %v933
    %v953 = vpack.c.bf16 %v936, %v935
    %v954 = vpack.c.bf16 %v938, %v937
    %v955 = vld [vmem:[%s7] sm:$0xf]
    %v956 = vld [vmem:[%s7 + $0x4] sm:$0xf]
    %v957 = vld [vmem:[%s7 + $0x8] sm:$0xf]
    %v958 = vld [vmem:[%s7 + $0xc] sm:$0xf]
    %v959 = vld [vmem:[%s7 + $0x10] sm:$0xf]
    %v960 = vld [vmem:[%s7 + $0x14] sm:$0xf]
    %v961 = vld [vmem:[%s7 + $0x18] sm:$0xf]
    %v962 = vld [vmem:[%s7 + $0x1c] sm:$0xf]
    %v963 = vld [vmem:[%s7 + $0x20] sm:$0xf]
    %v964 = vld [vmem:[%s7 + $0x24] sm:$0xf]
    %v965 = vld [vmem:[%s7 + $0x28] sm:$0xf]
    %v966 = vld [vmem:[%s7 + $0x2c] sm:$0xf]
    %v967 = vld [vmem:[%s7 + $0x30] sm:$0xf]
    %v968 = vld [vmem:[%s7 + $0x34] sm:$0xf]
    %v969 = vld [vmem:[%s7 + $0x38] sm:$0xf]
    %v970 = vld [vmem:[%s7 + $0x3c] sm:$0xf]
    %v971 = vld [vmem:[%s8] sm:$0x1]
    %v973 = vlaneseq
    %v974 = vshrl.u32 %v973, 7
    %v975 = vsub.s32 0, %v974
    %v976 = vrot.slane %v971, %v975
    %v994 = vunpack.c.l.b16 %v955
    %v995 = vunpack.c.l.b16 %v956
    %v996 = vunpack.c.l.b16 %v957
    %v997 = vunpack.c.l.b16 %v958
    %v998 = vunpack.c.l.b16 %v959
    %v999 = vunpack.c.l.b16 %v960
    %v1000 = vunpack.c.l.b16 %v961
    %v1001 = vunpack.c.l.b16 %v962
    %v1002 = vunpack.c.l.b16 %v963
    %v1003 = vunpack.c.l.b16 %v964
    %v1004 = vunpack.c.l.b16 %v965
    %v1005 = vunpack.c.l.b16 %v966
    %v1006 = vunpack.c.l.b16 %v967
    %v1007 = vunpack.c.l.b16 %v968
    %v1008 = vunpack.c.l.b16 %v969
    %v1009 = vunpack.c.l.b16 %v970
    %v1010 = vpack.c.b16 %v995, %v994
    %v1011 = vpack.c.b16 %v997, %v996
    %v1012 = vpack.c.b16 %v999, %v998
    %v1013 = vpack.c.b16 %v1001, %v1000
    %v1014 = vpack.c.b16 %v1003, %v1002
    %v1015 = vpack.c.b16 %v1005, %v1004
    %v1016 = vpack.c.b16 %v1007, %v1006
    %v1017 = vpack.c.b16 %v1009, %v1008
    %1026 = vmatprep.subr.bf16.mxu0 0
    %1027 = vmatpush1.bf16.msra.mxu0 %v1017
    %1028 = vmatprep.subr.bf16.mxu0 0
    %1029 = vmatpush1.bf16.msra.mxu0 %v1016
    %1030 = vmatprep.subr.bf16.mxu0 0
    %1031 = vmatpush1.bf16.msra.mxu0 %v1015
    %1032 = vmatprep.subr.bf16.mxu0 0
    %1033 = vmatpush1.bf16.msra.mxu0 %v1014
    %1034 = vmatprep.subr.bf16.mxu0 0
    %1035 = vmatpush1.bf16.msra.mxu0 %v1013
    %1036 = vmatprep.subr.bf16.mxu0 0
    %1037 = vmatpush1.bf16.msra.mxu0 %v1012
    %1038 = vmatprep.subr.bf16.mxu0 0
    %1039 = vmatpush1.bf16.msra.mxu0 %v1011
    %1040 = vmatprep.subr.bf16.mxu0 0
    %1041 = vmatpush1.bf16.msra.mxu0 %v1010
    %1042 = vmatprep.subr.bf16.mxu0 0
    %1043 = vmatpush2.bf16.msra.mxu0 0
    %1044 = vmatprep.subr.bf16.mxu0 0
    %1045 = vmatpush2.bf16.msra.mxu0 0
    %1046 = vmatprep.subr.bf16.mxu0 0
    %1047 = vmatpush2.bf16.msra.mxu0 0
    %1048 = vmatprep.subr.bf16.mxu0 0
    %1049 = vmatpush2.bf16.msra.mxu0 0
    %1050 = vmatprep.subr.bf16.mxu0 0
    %1051 = vmatpush2.bf16.msra.mxu0 0
    %1052 = vmatprep.subr.bf16.mxu0 0
    %1053 = vmatpush2.bf16.msra.mxu0 0
    %1054 = vmatprep.subr.bf16.mxu0 0
    %1055 = vmatpush2.bf16.msra.mxu0 0
    %1056 = vmatprep.subr.bf16.mxu0 0
    %1057 = vmatpush2.bf16.msra.mxu0 0
    %1058 = vmatprep.mubr.bf16.mxu0 0
    %1059 = vmatmul.mubr.bf16.gmra.mxu0 %v939
    %v1060 = vpop.f32.mrf.mxu0
    %v1061 = vadd.f32 %v976, %v1060
    %v1062 = vpop.f32.mrf.mxu0
    %v1063 = vpop.f32.mrf.mxu0
    %v1064 = vadd.f32 %v976, %v1063
    %v1065 = vpop.f32.mrf.mxu0
    %1066 = vmatprep.mubr.bf16.mxu0 0
    %1067 = vmatmul.mubr.bf16.gmra.mxu0 %v940
    %v1068 = vpop.f32.mrf.mxu0
    %v1069 = vadd.f32 %v976, %v1068
    %v1070 = vpop.f32.mrf.mxu0
    %v1071 = vpop.f32.mrf.mxu0
    %v1072 = vadd.f32 %v976, %v1071
    %v1073 = vpop.f32.mrf.mxu0
    %1074 = vmatprep.mubr.bf16.mxu0 0
    %1075 = vmatmul.mubr.bf16.gmra.mxu0 %v941
    %v1076 = vpop.f32.mrf.mxu0
    %v1077 = vadd.f32 %v976, %v1076
    %v1078 = vpop.f32.mrf.mxu0
    %v1079 = vpop.f32.mrf.mxu0
    %v1080 = vadd.f32 %v976, %v1079
    %v1081 = vpop.f32.mrf.mxu0
    %1082 = vmatprep.mubr.bf16.mxu0 0
    %1083 = vmatmul.mubr.bf16.gmra.mxu0 %v942
    %v1084 = vpop.f32.mrf.mxu0
    %v1085 = vadd.f32 %v976, %v1084
    %v1086 = vpop.f32.mrf.mxu0
    %v1087 = vpop.f32.mrf.mxu0
    %v1088 = vadd.f32 %v976, %v1087
    %v1089 = vpop.f32.mrf.mxu0
    %1090 = vmatprep.mubr.bf16.mxu0 0
    %1091 = vmatmul.mubr.bf16.gmra.mxu0 %v943
    %v1092 = vpop.f32.mrf.mxu0
    %v1093 = vadd.f32 %v976, %v1092
    %v1094 = vpop.f32.mrf.mxu0
    %v1095 = vpop.f32.mrf.mxu0
    %v1096 = vadd.f32 %v976, %v1095
    %v1097 = vpop.f32.mrf.mxu0
    %1098 = vmatprep.mubr.bf16.mxu0 0
    %1099 = vmatmul.mubr.bf16.gmra.mxu0 %v944
    %v1100 = vpop.f32.mrf.mxu0
    %v1101 = vadd.f32 %v976, %v1100
    %v1102 = vpop.f32.mrf.mxu0
    %v1103 = vpop.f32.mrf.mxu0
    %v1104 = vadd.f32 %v976, %v1103
    %v1105 = vpop.f32.mrf.mxu0
    %1106 = vmatprep.mubr.bf16.mxu0 0
    %1107 = vmatmul.mubr.bf16.gmra.mxu0 %v945
    %v1108 = vpop.f32.mrf.mxu0
    %v1109 = vadd.f32 %v976, %v1108
    %v1110 = vpop.f32.mrf.mxu0
    %v1111 = vpop.f32.mrf.mxu0
    %v1112 = vadd.f32 %v976, %v1111
    %v1113 = vpop.f32.mrf.mxu0
    %1114 = vmatprep.mubr.bf16.mxu0 0
    %1115 = vmatmul.mubr.bf16.gmra.mxu0 %v946
    %v1116 = vpop.f32.mrf.mxu0
    %v1117 = vadd.f32 %v976, %v1116
    %v1118 = vpop.f32.mrf.mxu0
    %v1119 = vpop.f32.mrf.mxu0
    %v1120 = vadd.f32 %v976, %v1119
    %v1121 = vpop.f32.mrf.mxu0
    %1122 = vmatprep.mubr.bf16.mxu0 0
    %1123 = vmatmul.mubr.bf16.gmra.mxu0 %v947
    %v1124 = vpop.f32.mrf.mxu0
    %v1125 = vadd.f32 %v976, %v1124
    %v1126 = vpop.f32.mrf.mxu0
    %v1127 = vpop.f32.mrf.mxu0
    %v1128 = vadd.f32 %v976, %v1127
    %v1129 = vpop.f32.mrf.mxu0
    %1130 = vmatprep.mubr.bf16.mxu0 0
    %1131 = vmatmul.mubr.bf16.gmra.mxu0 %v948
    %v1132 = vpop.f32.mrf.mxu0
    %v1133 = vadd.f32 %v976, %v1132
    %v1134 = vpop.f32.mrf.mxu0
    %v1135 = vpop.f32.mrf.mxu0
    %v1136 = vadd.f32 %v976, %v1135
    %v1137 = vpop.f32.mrf.mxu0
    %1138 = vmatprep.mubr.bf16.mxu0 0
    %1139 = vmatmul.mubr.bf16.gmra.mxu0 %v949
    %v1140 = vpop.f32.mrf.mxu0
    %v1141 = vadd.f32 %v976, %v1140
    %v1142 = vpop.f32.mrf.mxu0
    %v1143 = vpop.f32.mrf.mxu0
    %v1144 = vadd.f32 %v976, %v1143
    %v1145 = vpop.f32.mrf.mxu0
    %1146 = vmatprep.mubr.bf16.mxu0 0
    %1147 = vmatmul.mubr.bf16.gmra.mxu0 %v950
    %v1148 = vpop.f32.mrf.mxu0
    %v1149 = vadd.f32 %v976, %v1148
    %v1150 = vpop.f32.mrf.mxu0
    %v1151 = vpop.f32.mrf.mxu0
    %v1152 = vadd.f32 %v976, %v1151
    %v1153 = vpop.f32.mrf.mxu0
    %1154 = vmatprep.mubr.bf16.mxu0 0
    %1155 = vmatmul.mubr.bf16.gmra.mxu0 %v951
    %v1156 = vpop.f32.mrf.mxu0
    %v1157 = vadd.f32 %v976, %v1156
    %v1158 = vpop.f32.mrf.mxu0
    %v1159 = vpop.f32.mrf.mxu0
    %v1160 = vadd.f32 %v976, %v1159
    %v1161 = vpop.f32.mrf.mxu0
    %1162 = vmatprep.mubr.bf16.mxu0 0
    %1163 = vmatmul.mubr.bf16.gmra.mxu0 %v952
    %v1164 = vpop.f32.mrf.mxu0
    %v1165 = vadd.f32 %v976, %v1164
    %v1166 = vpop.f32.mrf.mxu0
    %v1167 = vpop.f32.mrf.mxu0
    %v1168 = vadd.f32 %v976, %v1167
    %v1169 = vpop.f32.mrf.mxu0
    %1170 = vmatprep.mubr.bf16.mxu0 0
    %1171 = vmatmul.mubr.bf16.gmra.mxu0 %v953
    %v1172 = vpop.f32.mrf.mxu0
    %v1173 = vadd.f32 %v976, %v1172
    %v1174 = vpop.f32.mrf.mxu0
    %v1175 = vpop.f32.mrf.mxu0
    %v1176 = vadd.f32 %v976, %v1175
    %v1177 = vpop.f32.mrf.mxu0
    %1178 = vmatprep.mubr.bf16.mxu0 0
    %1179 = vmatmul.mubr.bf16.gmra.mxu0 %v954
    %v1180 = vpop.f32.mrf.mxu0
    %v1181 = vadd.f32 %v976, %v1180
    %v1182 = vpop.f32.mrf.mxu0
    %v1183 = vpop.f32.mrf.mxu0
    %v1184 = vadd.f32 %v976, %v1183
    %v1185 = vpop.f32.mrf.mxu0
    %1186 = vdwg.mxu0
    %v1187 = vmax.f32 %v1061, 0.0
    %v1188 = vmax.f32 %v1064, 0.0
    %v1189 = vmax.f32 %v1069, 0.0
    %v1190 = vmax.f32 %v1072, 0.0
    %v1191 = vmax.f32 %v1077, 0.0
    %v1192 = vmax.f32 %v1080, 0.0
    %v1193 = vmax.f32 %v1085, 0.0
    %v1194 = vmax.f32 %v1088, 0.0
    %v1195 = vmax.f32 %v1093, 0.0
    %v1196 = vmax.f32 %v1096, 0.0
    %v1197 = vmax.f32 %v1101, 0.0
    %v1198 = vmax.f32 %v1104, 0.0
    %v1199 = vmax.f32 %v1109, 0.0
    %v1200 = vmax.f32 %v1112, 0.0
    %v1201 = vmax.f32 %v1117, 0.0
    %v1202 = vmax.f32 %v1120, 0.0
    %v1203 = vmax.f32 %v1125, 0.0
    %v1204 = vmax.f32 %v1128, 0.0
    %v1205 = vmax.f32 %v1133, 0.0
    %v1206 = vmax.f32 %v1136, 0.0
    %v1207 = vmax.f32 %v1141, 0.0
    %v1208 = vmax.f32 %v1144, 0.0
    %v1209 = vmax.f32 %v1149, 0.0
    %v1210 = vmax.f32 %v1152, 0.0
    %v1211 = vmax.f32 %v1157, 0.0
    %v1212 = vmax.f32 %v1160, 0.0
    %v1213 = vmax.f32 %v1165, 0.0
    %v1214 = vmax.f32 %v1168, 0.0
    %v1215 = vmax.f32 %v1173, 0.0
    %v1216 = vmax.f32 %v1176, 0.0
    %v1217 = vmax.f32 %v1181, 0.0
    %v1218 = vmax.f32 %v1184, 0.0
    %v1219 = vpack.c.bf16 %v1188, %v1187
    %v1220 = vpack.c.bf16 %v1190, %v1189
    %v1221 = vpack.c.bf16 %v1192, %v1191
    %v1222 = vpack.c.bf16 %v1194, %v1193
    %v1223 = vpack.c.bf16 %v1196, %v1195
    %v1224 = vpack.c.bf16 %v1198, %v1197
    %v1225 = vpack.c.bf16 %v1200, %v1199
    %v1226 = vpack.c.bf16 %v1202, %v1201
    %v1227 = vpack.c.bf16 %v1204, %v1203
    %v1228 = vpack.c.bf16 %v1206, %v1205
    %v1229 = vpack.c.bf16 %v1208, %v1207
    %v1230 = vpack.c.bf16 %v1210, %v1209
    %v1231 = vpack.c.bf16 %v1212, %v1211
    %v1232 = vpack.c.bf16 %v1214, %v1213
    %v1233 = vpack.c.bf16 %v1216, %v1215
    %v1234 = vpack.c.bf16 %v1218, %v1217
    %v1235 = vld [vmem:[%s9] sm:$0xf]
    %v1236 = vld [vmem:[%s9 + $0x4] sm:$0xf]
    %v1237 = vld [vmem:[%s9 + $0x8] sm:$0xf]
    %v1238 = vld [vmem:[%s9 + $0xc] sm:$0xf]
    %v1239 = vld [vmem:[%s9 + $0x10] sm:$0xf]
    %v1240 = vld [vmem:[%s9 + $0x14] sm:$0xf]
    %v1241 = vld [vmem:[%s9 + $0x18] sm:$0xf]
    %v1242 = vld [vmem:[%s9 + $0x1c] sm:$0xf]
    %v1243 = vld [vmem:[%s9 + $0x20] sm:$0xf]
    %v1244 = vld [vmem:[%s9 + $0x24] sm:$0xf]
    %v1245 = vld [vmem:[%s9 + $0x28] sm:$0xf]
    %v1246 = vld [vmem:[%s9 + $0x2c] sm:$0xf]
    %v1247 = vld [vmem:[%s9 + $0x30] sm:$0xf]
    %v1248 = vld [vmem:[%s9 + $0x34] sm:$0xf]
    %v1249 = vld [vmem:[%s9 + $0x38] sm:$0xf]
    %v1250 = vld [vmem:[%s9 + $0x3c] sm:$0xf]
    %v1251 = vld [vmem:[%s10] sm:$0x1]
    %v1253 = vlaneseq
    %v1254 = vshrl.u32 %v1253, 7
    %v1255 = vsub.s32 0, %v1254
    %v1256 = vrot.slane %v1251, %v1255
    %v1274 = vunpack.c.l.b16 %v1235
    %v1275 = vunpack.c.l.b16 %v1236
    %v1276 = vunpack.c.l.b16 %v1237
    %v1277 = vunpack.c.l.b16 %v1238
    %v1278 = vunpack.c.l.b16 %v1239
    %v1279 = vunpack.c.l.b16 %v1240
    %v1280 = vunpack.c.l.b16 %v1241
    %v1281 = vunpack.c.l.b16 %v1242
    %v1282 = vunpack.c.l.b16 %v1243
    %v1283 = vunpack.c.l.b16 %v1244
    %v1284 = vunpack.c.l.b16 %v1245
    %v1285 = vunpack.c.l.b16 %v1246
    %v1286 = vunpack.c.l.b16 %v1247
    %v1287 = vunpack.c.l.b16 %v1248
    %v1288 = vunpack.c.l.b16 %v1249
    %v1289 = vunpack.c.l.b16 %v1250
    %v1290 = vpack.c.b16 %v1275, %v1274
    %v1291 = vpack.c.b16 %v1277, %v1276
    %v1292 = vpack.c.b16 %v1279, %v1278
    %v1293 = vpack.c.b16 %v1281, %v1280
    %v1294 = vpack.c.b16 %v1283, %v1282
    %v1295 = vpack.c.b16 %v1285, %v1284
    %v1296 = vpack.c.b16 %v1287, %v1286
    %v1297 = vpack.c.b16 %v1289, %v1288
    %1306 = vmatprep.subr.bf16.mxu0 0
    %1307 = vmatpush1.bf16.msra.mxu0 %v1297
    %1308 = vmatprep.subr.bf16.mxu0 0
    %1309 = vmatpush1.bf16.msra.mxu0 %v1296
    %1310 = vmatprep.subr.bf16.mxu0 0
    %1311 = vmatpush1.bf16.msra.mxu0 %v1295
    %1312 = vmatprep.subr.bf16.mxu0 0
    %1313 = vmatpush1.bf16.msra.mxu0 %v1294
    %1314 = vmatprep.subr.bf16.mxu0 0
    %1315 = vmatpush1.bf16.msra.mxu0 %v1293
    %1316 = vmatprep.subr.bf16.mxu0 0
    %1317 = vmatpush1.bf16.msra.mxu0 %v1292
    %1318 = vmatprep.subr.bf16.mxu0 0
    %1319 = vmatpush1.bf16.msra.mxu0 %v1291
    %1320 = vmatprep.subr.bf16.mxu0 0
    %1321 = vmatpush1.bf16.msra.mxu0 %v1290
    %1322 = vmatprep.subr.bf16.mxu0 0
    %1323 = vmatpush2.bf16.msra.mxu0 0
    %1324 = vmatprep.subr.bf16.mxu0 0
    %1325 = vmatpush2.bf16.msra.mxu0 0
    %1326 = vmatprep.subr.bf16.mxu0 0
    %1327 = vmatpush2.bf16.msra.mxu0 0
    %1328 = vmatprep.subr.bf16.mxu0 0
    %1329 = vmatpush2.bf16.msra.mxu0 0
    %1330 = vmatprep.subr.bf16.mxu0 0
    %1331 = vmatpush2.bf16.msra.mxu0 0
    %1332 = vmatprep.subr.bf16.mxu0 0
    %1333 = vmatpush2.bf16.msra.mxu0 0
    %1334 = vmatprep.subr.bf16.mxu0 0
    %1335 = vmatpush2.bf16.msra.mxu0 0
    %1336 = vmatprep.subr.bf16.mxu0 0
    %1337 = vmatpush2.bf16.msra.mxu0 0
    %1338 = vmatprep.mubr.bf16.mxu0 0
    %1339 = vmatmul.mubr.bf16.gmra.mxu0 %v1219
    %v1340 = vpop.f32.mrf.mxu0
    %v1341 = vadd.f32 %v1256, %v1340
    %v1342 = vpop.f32.mrf.mxu0
    %v1343 = vpop.f32.mrf.mxu0
    %v1344 = vadd.f32 %v1256, %v1343
    %v1345 = vpop.f32.mrf.mxu0
    %1346 = vmatprep.mubr.bf16.mxu0 0
    %1347 = vmatmul.mubr.bf16.gmra.mxu0 %v1220
    %v1348 = vpop.f32.mrf.mxu0
    %v1349 = vadd.f32 %v1256, %v1348
    %v1350 = vpop.f32.mrf.mxu0
    %v1351 = vpop.f32.mrf.mxu0
    %v1352 = vadd.f32 %v1256, %v1351
    %v1353 = vpop.f32.mrf.mxu0
    %1354 = vmatprep.mubr.bf16.mxu0 0
    %1355 = vmatmul.mubr.bf16.gmra.mxu0 %v1221
    %v1356 = vpop.f32.mrf.mxu0
    %v1357 = vadd.f32 %v1256, %v1356
    %v1358 = vpop.f32.mrf.mxu0
    %v1359 = vpop.f32.mrf.mxu0
    %v1360 = vadd.f32 %v1256, %v1359
    %v1361 = vpop.f32.mrf.mxu0
    %1362 = vmatprep.mubr.bf16.mxu0 0
    %1363 = vmatmul.mubr.bf16.gmra.mxu0 %v1222
    %v1364 = vpop.f32.mrf.mxu0
    %v1365 = vadd.f32 %v1256, %v1364
    %v1366 = vpop.f32.mrf.mxu0
    %v1367 = vpop.f32.mrf.mxu0
    %v1368 = vadd.f32 %v1256, %v1367
    %v1369 = vpop.f32.mrf.mxu0
    %1370 = vmatprep.mubr.bf16.mxu0 0
    %1371 = vmatmul.mubr.bf16.gmra.mxu0 %v1223
    %v1372 = vpop.f32.mrf.mxu0
    %v1373 = vadd.f32 %v1256, %v1372
    %v1374 = vpop.f32.mrf.mxu0
    %v1375 = vpop.f32.mrf.mxu0
    %v1376 = vadd.f32 %v1256, %v1375
    %v1377 = vpop.f32.mrf.mxu0
    %1378 = vmatprep.mubr.bf16.mxu0 0
    %1379 = vmatmul.mubr.bf16.gmra.mxu0 %v1224
    %v1380 = vpop.f32.mrf.mxu0
    %v1381 = vadd.f32 %v1256, %v1380
    %v1382 = vpop.f32.mrf.mxu0
    %v1383 = vpop.f32.mrf.mxu0
    %v1384 = vadd.f32 %v1256, %v1383
    %v1385 = vpop.f32.mrf.mxu0
    %1386 = vmatprep.mubr.bf16.mxu0 0
    %1387 = vmatmul.mubr.bf16.gmra.mxu0 %v1225
    %v1388 = vpop.f32.mrf.mxu0
    %v1389 = vadd.f32 %v1256, %v1388
    %v1390 = vpop.f32.mrf.mxu0
    %v1391 = vpop.f32.mrf.mxu0
    %v1392 = vadd.f32 %v1256, %v1391
    %v1393 = vpop.f32.mrf.mxu0
    %1394 = vmatprep.mubr.bf16.mxu0 0
    %1395 = vmatmul.mubr.bf16.gmra.mxu0 %v1226
    %v1396 = vpop.f32.mrf.mxu0
    %v1397 = vadd.f32 %v1256, %v1396
    %v1398 = vpop.f32.mrf.mxu0
    %v1399 = vpop.f32.mrf.mxu0
    %v1400 = vadd.f32 %v1256, %v1399
    %v1401 = vpop.f32.mrf.mxu0
    %1402 = vmatprep.mubr.bf16.mxu0 0
    %1403 = vmatmul.mubr.bf16.gmra.mxu0 %v1227
    %v1404 = vpop.f32.mrf.mxu0
    %v1405 = vadd.f32 %v1256, %v1404
    %v1406 = vpop.f32.mrf.mxu0
    %v1407 = vpop.f32.mrf.mxu0
    %v1408 = vadd.f32 %v1256, %v1407
    %v1409 = vpop.f32.mrf.mxu0
    %1410 = vmatprep.mubr.bf16.mxu0 0
    %1411 = vmatmul.mubr.bf16.gmra.mxu0 %v1228
    %v1412 = vpop.f32.mrf.mxu0
    %v1413 = vadd.f32 %v1256, %v1412
    %v1414 = vpop.f32.mrf.mxu0
    %v1415 = vpop.f32.mrf.mxu0
    %v1416 = vadd.f32 %v1256, %v1415
    %v1417 = vpop.f32.mrf.mxu0
    %1418 = vmatprep.mubr.bf16.mxu0 0
    %1419 = vmatmul.mubr.bf16.gmra.mxu0 %v1229
    %v1420 = vpop.f32.mrf.mxu0
    %v1421 = vadd.f32 %v1256, %v1420
    %v1422 = vpop.f32.mrf.mxu0
    %v1423 = vpop.f32.mrf.mxu0
    %v1424 = vadd.f32 %v1256, %v1423
    %v1425 = vpop.f32.mrf.mxu0
    %1426 = vmatprep.mubr.bf16.mxu0 0
    %1427 = vmatmul.mubr.bf16.gmra.mxu0 %v1230
    %v1428 = vpop.f32.mrf.mxu0
    %v1429 = vadd.f32 %v1256, %v1428
    %v1430 = vpop.f32.mrf.mxu0
    %v1431 = vpop.f32.mrf.mxu0
    %v1432 = vadd.f32 %v1256, %v1431
    %v1433 = vpop.f32.mrf.mxu0
    %1434 = vmatprep.mubr.bf16.mxu0 0
    %1435 = vmatmul.mubr.bf16.gmra.mxu0 %v1231
    %v1436 = vpop.f32.mrf.mxu0
    %v1437 = vadd.f32 %v1256, %v1436
    %v1438 = vpop.f32.mrf.mxu0
    %v1439 = vpop.f32.mrf.mxu0
    %v1440 = vadd.f32 %v1256, %v1439
    %v1441 = vpop.f32.mrf.mxu0
    %1442 = vmatprep.mubr.bf16.mxu0 0
    %1443 = vmatmul.mubr.bf16.gmra.mxu0 %v1232
    %v1444 = vpop.f32.mrf.mxu0
    %v1445 = vadd.f32 %v1256, %v1444
    %v1446 = vpop.f32.mrf.mxu0
    %v1447 = vpop.f32.mrf.mxu0
    %v1448 = vadd.f32 %v1256, %v1447
    %v1449 = vpop.f32.mrf.mxu0
    %1450 = vmatprep.mubr.bf16.mxu0 0
    %1451 = vmatmul.mubr.bf16.gmra.mxu0 %v1233
    %v1452 = vpop.f32.mrf.mxu0
    %v1453 = vadd.f32 %v1256, %v1452
    %v1454 = vpop.f32.mrf.mxu0
    %v1455 = vpop.f32.mrf.mxu0
    %v1456 = vadd.f32 %v1256, %v1455
    %v1457 = vpop.f32.mrf.mxu0
    %1458 = vmatprep.mubr.bf16.mxu0 0
    %1459 = vmatmul.mubr.bf16.gmra.mxu0 %v1234
    %v1460 = vpop.f32.mrf.mxu0
    %v1461 = vadd.f32 %v1256, %v1460
    %v1462 = vpop.f32.mrf.mxu0
    %v1463 = vpop.f32.mrf.mxu0
    %v1464 = vadd.f32 %v1256, %v1463
    %v1465 = vpop.f32.mrf.mxu0
    %1466 = vdwg.mxu0
    %1467 = vst [vmem:[#allocation2] sm:$0xff] %v1341
    %1468 = vst [vmem:[#allocation2 + $0x8] sm:$0xff] %v1344
    %1469 = vst [vmem:[#allocation2 + $0x10] sm:$0xff] %v1349
    %1470 = vst [vmem:[#allocation2 + $0x18] sm:$0xff] %v1352
    %1471 = vst [vmem:[#allocation2 + $0x20] sm:$0xff] %v1357
    %1472 = vst [vmem:[#allocation2 + $0x28] sm:$0xff] %v1360
    %1473 = vst [vmem:[#allocation2 + $0x30] sm:$0xff] %v1365
    %1474 = vst [vmem:[#allocation2 + $0x38] sm:$0xff] %v1368
    %1475 = vst [vmem:[#allocation2 + $0x40] sm:$0xff] %v1373
    %1476 = vst [vmem:[#allocation2 + $0x48] sm:$0xff] %v1376
    %1477 = vst [vmem:[#allocation2 + $0x50] sm:$0xff] %v1381
    %1478 = vst [vmem:[#allocation2 + $0x58] sm:$0xff] %v1384
    %1479 = vst [vmem:[#allocation2 + $0x60] sm:$0xff] %v1389
    %1480 = vst [vmem:[#allocation2 + $0x68] sm:$0xff] %v1392
    %1481 = vst [vmem:[#allocation2 + $0x70] sm:$0xff] %v1397
    %1482 = vst [vmem:[#allocation2 + $0x78] sm:$0xff] %v1400
    %1483 = vst [vmem:[#allocation2 + $0x80] sm:$0xff] %v1405
    %1484 = vst [vmem:[#allocation2 + $0x88] sm:$0xff] %v1408
    %1485 = vst [vmem:[#allocation2 + $0x90] sm:$0xff] %v1413
    %1486 = vst [vmem:[#allocation2 + $0x98] sm:$0xff] %v1416
    %1487 = vst [vmem:[#allocation2 + $0xa0] sm:$0xff] %v1421
    %1488 = vst [vmem:[#allocation2 + $0xa8] sm:$0xff] %v1424
    %1489 = vst [vmem:[#allocation2 + $0xb0] sm:$0xff] %v1429
    %1490 = vst [vmem:[#allocation2 + $0xb8] sm:$0xff] %v1432
    %1491 = vst [vmem:[#allocation2 + $0xc0] sm:$0xff] %v1437
    %1492 = vst [vmem:[#allocation2 + $0xc8] sm:$0xff] %v1440
    %1493 = vst [vmem:[#allocation2 + $0xd0] sm:$0xff] %v1445
    %1494 = vst [vmem:[#allocation2 + $0xd8] sm:$0xff] %v1448
    %1495 = vst [vmem:[#allocation2 + $0xe0] sm:$0xff] %v1453
    %1496 = vst [vmem:[#allocation2 + $0xe8] sm:$0xff] %v1456
    %1497 = vst [vmem:[#allocation2 + $0xf0] sm:$0xff] %v1461
    %1498 = vst [vmem:[#allocation2 + $0xf8] sm:$0xff] %v1464
    // Predicated region
    $region46: #{tpu_custom_call.1} parent=1 // pred_check
      _
    $region47: #{tpu_custom_call.1} parent=1 // pred_check_branch
      %1500 = sbr.rel (0) target = $region49
    $region48: #{tpu_custom_call.1} parent=1 // pred_region
      %s1502 = ssub.s32 4096, 4096
      %1503 = vsyncadd [#allocation3], %s1502
      %s1504 = sshll.u32 [#allocation2], 4
      %s1505 = int_to_ptr.vmem [resolvable:$true] %s1504
      %1510 = dma.vmem_to_hbm [thread:$0]  %s1505, 4096, %s11, [#allocation3], 128, 128, 8
    $region49: #{tpu_custom_call.1} parent=1 // pred_fallthru
      _
    // Predicated region
    $region50: #{tpu_custom_call.1} parent=1 // pred_check
      _
    $region51: #{tpu_custom_call.1} parent=1 // pred_check_branch
      %1512 = sbr.rel (0) target = $region53
    $region52: #{tpu_custom_call.1} parent=1 // pred_region
      %1513 = dma.done [#allocation3], 4096
    $region53: #{tpu_custom_call.1} parent=1 // pred_fallthru
      _
    %1514 = vsyncpa [#allocation3], 1

</llo_original>
